<compile_context>
chip_gen: v6e
topology: v6e:2x2x1
jax: 0.10.0
libtpu: 0.0.40
codegen_flags: <defaults>
</compile_context>

<pallas_src>
import functools

import jax
import jax.numpy as jnp
from jax.experimental import pallas as pl
from jax.experimental.pallas import tpu as pltpu


def blip2_attention_kernel(x_ref, qkvw_ref, qkvb_ref, projw_ref, projb_ref,
                           out_ref, *, num_heads, head_dim, scale):
    """One batch element per grid step.

    x_ref:     (1, T, E)   input hidden states
    qkvw_ref:  (E, 3E)     fused QKV weight (pre-transposed, typically bf16)
    qkvb_ref:  (1, 3E)     fused QKV bias (k-part is zero, as in the module)
    projw_ref: (E, E)      output projection weight (pre-transposed, bf16)
    projb_ref: (1, E)      output projection bias
    out_ref:   (1, T, E)   attention output
    """
    T = x_ref.shape[1]
    E = num_heads * head_dim
    w_dtype = qkvw_ref.dtype            # compute dtype for the big matmuls

    # ---- fused QKV projection: one MXU matmul, f32 accumulation ----
    x = x_ref[0].astype(w_dtype)                                    # (T, E)
    mixed = jnp.dot(x, qkvw_ref[...],
                    preferred_element_type=jnp.float32)             # (T, 3E)
    mixed = mixed + qkvb_ref[0].astype(jnp.float32)   # single bias add, hoisted

    # ---- split Q/K/V and bring heads to the front: (T, E) -> (H, T, hd) ----
    def split_heads(cols):
        cols = cols.reshape(T, num_heads, head_dim)
        return pltpu.einshape("thd->htd", cols)

    q = split_heads(mixed[:, 0:E]) * scale      # fold scale into q (H,T,hd mul)
    k = split_heads(mixed[:, E:2 * E])
    v = split_heads(mixed[:, 2 * E:3 * E])

    # ---- heads-batched scaled-dot-product attention (all in f32) ----
    # Contraction on the LAST dim of both operands -> no explicit k transpose.
    scores = jnp.einsum("htd,hsd->hts", q, k,
                        preferred_element_type=jnp.float32)          # (H,T,T)
    scores = scores - jnp.max(scores, axis=-1, keepdims=True)
    e = jnp.exp(scores)
    denom = jnp.sum(e, axis=-1, keepdims=True)
    probs = e * pl.reciprocal(denom, approx=True)     # softmax(dim=-1), EUP div
    # attention dropout: eval-mode identity. head_mask=None path.

    ctx = jnp.einsum("hts,hsd->htd", probs, v,
                     preferred_element_type=jnp.float32)             # (H,T,hd)

    # permute(0, 2, 1, 3).reshape(..., E): (H, T, hd) -> (T, H, hd) -> (T, E)
    ctx = pltpu.einshape("htd->thd", ctx).reshape(T, E)

    # ---- output projection (bf16 operands when weights are bf16) ----
    out = jnp.dot(ctx.astype(projw_ref.dtype), projw_ref[...],
                  preferred_element_type=jnp.float32)
    out = out + projb_ref[0].astype(jnp.float32)
    out_ref[0] = out.astype(out_ref.dtype)


def blip2_attention(hidden_states, qkv_w, qkv_b, proj_w, proj_b, *, num_heads):
    B, T, E = hidden_states.shape
    head_dim = E // num_heads
    assert head_dim * num_heads == E
    scale = head_dim ** (-0.5)

    kernel = functools.partial(
        blip2_attention_kernel,
        num_heads=num_heads, head_dim=head_dim, scale=scale)

    return pl.pallas_call(
        kernel,
        out_shape=jax.ShapeDtypeStruct((B, T, E), hidden_states.dtype),
        grid_spec=pltpu.PrefetchScalarGridSpec(
            num_scalar_prefetch=0,
            grid=(B,),
            in_specs=[
                pl.BlockSpec((1, T, E), lambda b: (b, 0, 0)),
                # Constant-index weights: whole-resident across the batch grid.
                pl.BlockSpec((E, 3 * E), lambda b: (0, 0)),
                pl.BlockSpec((1, 3 * E), lambda b: (0, 0)),
                pl.BlockSpec((E, E), lambda b: (0, 0)),
                pl.BlockSpec((1, E), lambda b: (0, 0)),
            ],
            out_specs=pl.BlockSpec((1, T, E), lambda b: (b, 0, 0)),
        ),
        compiler_params=pltpu.CompilerParams(
            dimension_semantics=("parallel",),
            # Explicit scoped-VMEM budget so the whole-weight-resident design
            # also fits real BLIP-2 sizes (E=1408, bf16 weights).
            vmem_limit_bytes=64 * 1024 * 1024,
        ),
    )(hidden_states, qkv_w, qkv_b, proj_w, proj_b)


def blip2_attention_reference(hidden_states, qkv_w, qkv_b, proj_w, proj_b,
                              *, num_heads):
    """Pure-JAX f32 reference mirroring the PyTorch forward (eval mode)."""
    B, T, E = hidden_states.shape
    hd = E // num_heads
    scale = hd ** (-0.5)
    w = qkv_w.astype(jnp.float32)
    pw = proj_w.astype(jnp.float32)
    mixed = hidden_states.astype(jnp.float32) @ w + qkv_b[0]         # (B, T, 3E)
    mixed = mixed.reshape(B, T, 3, num_heads, hd).transpose(2, 0, 3, 1, 4)
    q, k, v = mixed[0], mixed[1], mixed[2]                           # (B, H, T, hd)
    scores = jnp.einsum('bhqd,bhkd->bhqk', q, k) * scale
    probs = jax.nn.softmax(scores, axis=-1)
    ctx = jnp.einsum('bhqk,bhkd->bhqd', probs, v)                    # (B, H, T, hd)
    ctx = ctx.transpose(0, 2, 1, 3).reshape(B, T, E)
    return ctx @ pw + proj_b[0]


if __name__ == "__main__":
    # Small config consistent with the module: hidden_size=32, num_heads=4.
    B, T, E = 2, 8, 32
    num_heads = 4
    dtype = jnp.float32

    key = jax.random.PRNGKey(0)
    k_x, k_qkv, k_qb, k_vb, k_pw, k_pb = jax.random.split(key, 6)

    hidden_states = jax.random.normal(k_x, (B, T, E), dtype=dtype)

    # nn.Linear(E, 3E, bias=False) weight, stored transposed as (E, 3E).
    qkv_w = jax.random.normal(k_qkv, (E, 3 * E), dtype=dtype) * 0.02
    # qkv bias = cat(q_bias, zeros_like(k), v_bias)  (config.qkv_bias=True path)
    q_bias = jax.random.normal(k_qb, (E,), dtype=dtype) * 0.02
    v_bias = jax.random.normal(k_vb, (E,), dtype=dtype) * 0.02
    qkv_b = jnp.concatenate([q_bias, jnp.zeros((E,), dtype=dtype), v_bias])
    qkv_b = qkv_b.reshape(1, 3 * E)

    # nn.Linear(E, E) projection, stored transposed as (E, E), plus bias.
    proj_w = jax.random.normal(k_pw, (E, E), dtype=dtype) * 0.02
    proj_b = (jax.random.normal(k_pb, (E,), dtype=dtype) * 0.02).reshape(1, E)

    # Feed weights to the kernel as bf16 (MXU bf16 path); biases stay f32.
    qkv_w_bf16 = qkv_w.astype(jnp.bfloat16)
    proj_w_bf16 = proj_w.astype(jnp.bfloat16)

    out = blip2_attention(hidden_states, qkv_w_bf16, qkv_b,
                          proj_w_bf16, proj_b, num_heads=num_heads)
    out = jax.block_until_ready(out)

    # Reference uses the same (bf16-quantized) weights, computed in f32, so the
    # only kernel-vs-ref differences are the in-kernel bf16 activation casts
    # and the EUP approximate reciprocal in the softmax.
    ref = blip2_attention_reference(hidden_states, qkv_w_bf16, qkv_b,
                                    proj_w_bf16, proj_b, num_heads=num_heads)
    assert out.shape == (B, T, E)
    assert jnp.allclose(out, ref, atol=2e-3, rtol=2e-3)

    print("KERNEL_OK")
</pallas_src>

<mosaic_0001>
module attributes {stable_mosaic.version = 11 : i64} {
  func.func @blip2_attention_kernel(%arg0: i32, %arg1: memref<1x8x32xf32, #tpu.memory_space<vmem>>, %arg2: memref<32x96xbf16, #tpu.memory_space<vmem>>, %arg3: memref<1x96xf32, #tpu.memory_space<vmem>>, %arg4: memref<32x32xbf16, #tpu.memory_space<vmem>>, %arg5: memref<1x32xf32, #tpu.memory_space<vmem>>, %arg6: memref<1x8x32xf32, #tpu.memory_space<vmem>>) attributes {dimension_semantics = [#tpu.dimension_semantics<parallel>], iteration_bounds = array<i64: 2>, scalar_prefetch = 0 : i64, scratch_operands = 0 : i64, tpu.core_type = #tpu.core_type<tc>, window_params = [{transform_indices = @transform_0, window_bounds = array<i64: 1, 8, 32>}, {pipeline_mode = #tpu.pipeline_mode<synchronous>, transform_indices = @transform_1, window_bounds = array<i64: 32, 96>}, {pipeline_mode = #tpu.pipeline_mode<synchronous>, transform_indices = @transform_2, window_bounds = array<i64: 1, 96>}, {pipeline_mode = #tpu.pipeline_mode<synchronous>, transform_indices = @transform_3, window_bounds = array<i64: 32, 32>}, {pipeline_mode = #tpu.pipeline_mode<synchronous>, transform_indices = @transform_4, window_bounds = array<i64: 1, 32>}, {transform_indices = @transform_5, window_bounds = array<i64: 1, 8, 32>}]} {
    %c0 = arith.constant 0 : index
    %c0_0 = arith.constant 0 : index
    %c0_1 = arith.constant 0 : index
    %0 = vector.load %arg1[%c0, %c0_0, %c0_1] : memref<1x8x32xf32, #tpu.memory_space<vmem>>, vector<1x8x32xf32>
    %1 = vector.shape_cast %0 : vector<1x8x32xf32> to vector<8x32xf32>
    %2 = arith.truncf %1 : vector<8x32xf32> to vector<8x32xbf16>
    %c0_2 = arith.constant 0 : index
    %c0_3 = arith.constant 0 : index
    %3 = vector.load %arg2[%c0_2, %c0_3] : memref<32x96xbf16, #tpu.memory_space<vmem>>, vector<32x96xbf16>
    %cst = arith.constant dense<0.000000e+00> : vector<8x96xf32>
    %4 = tpu.matmul %2, %3, %cst {dimension_numbers = #tpu.dot_dimension_numbers<[1], [0], [0], [1], [0, 0, 1, 1], [], []>} : vector<8x32xbf16>, vector<32x96xbf16>, vector<8x96xf32> -> vector<8x96xf32>
    %c0_4 = arith.constant 0 : index
    %c0_5 = arith.constant 0 : index
    %5 = vector.load %arg3[%c0_4, %c0_5] : memref<1x96xf32, #tpu.memory_space<vmem>>, vector<1x96xf32>
    %6 = vector.shape_cast %5 : vector<1x96xf32> to vector<96xf32>
    %7 = vector.shape_cast %6 : vector<96xf32> to vector<1x96xf32>
    %8 = vector.broadcast %7 : vector<1x96xf32> to vector<8x96xf32>
    %9 = arith.addf %4, %8 : vector<8x96xf32>
    %10 = vector.extract_strided_slice %9 {offsets = [0, 0], sizes = [8, 32], strides = [1, 1]} : vector<8x96xf32> to vector<8x32xf32>
    %11 = vector.shape_cast %10 : vector<8x32xf32> to vector<8x4x8xf32>
    %12 = tpu.transpose %11, [1, 0, 2] : vector<8x4x8xf32> -> vector<4x8x8xf32>
    %cst_6 = arith.constant 0.353553385 : f32
    %13 = vector.broadcast %cst_6 : f32 to vector<4x8x8xf32>
    %14 = arith.mulf %12, %13 : vector<4x8x8xf32>
    %15 = vector.extract_strided_slice %9 {offsets = [0, 32], sizes = [8, 32], strides = [1, 1]} : vector<8x96xf32> to vector<8x32xf32>
    %16 = vector.shape_cast %15 : vector<8x32xf32> to vector<8x4x8xf32>
    %17 = tpu.transpose %16, [1, 0, 2] : vector<8x4x8xf32> -> vector<4x8x8xf32>
    %18 = vector.extract_strided_slice %9 {offsets = [0, 64], sizes = [8, 32], strides = [1, 1]} : vector<8x96xf32> to vector<8x32xf32>
    %19 = vector.shape_cast %18 : vector<8x32xf32> to vector<8x4x8xf32>
    %20 = tpu.transpose %19, [1, 0, 2] : vector<8x4x8xf32> -> vector<4x8x8xf32>
    "tpu.trace_start"() <{level = 10 : i32, message = "htd,hsd->hts"}> : () -> ()
    %cst_7 = arith.constant dense<0.000000e+00> : vector<4x8x8xf32>
    %21 = tpu.matmul %14, %17, %cst_7 {dimension_numbers = #tpu.dot_dimension_numbers<[2], [2], [1], [1], [0, 0, 0, 1, 1, 1], [0], [0]>} : vector<4x8x8xf32>, vector<4x8x8xf32>, vector<4x8x8xf32> -> vector<4x8x8xf32>
    "tpu.trace_stop"() : () -> ()
    %cst_8 = arith.constant dense<0xFF800000> : vector<4x8xf32>
    %22 = vector.multi_reduction <maximumf>, %21, %cst_8 [2] : vector<4x8x8xf32> to vector<4x8xf32>
    %23 = vector.shape_cast %22 : vector<4x8xf32> to vector<4x8x1xf32>
    %24 = vector.broadcast %23 : vector<4x8x1xf32> to vector<4x8x8xf32>
    %25 = arith.subf %21, %24 : vector<4x8x8xf32>
    %26 = math.exp %25 : vector<4x8x8xf32>
    %cst_9 = arith.constant dense<0.000000e+00> : vector<4x8xf32>
    %27 = vector.multi_reduction <add>, %26, %cst_9 [2] : vector<4x8x8xf32> to vector<4x8xf32>
    %28 = vector.shape_cast %27 : vector<4x8xf32> to vector<4x8x1xf32>
    %29 = tpu.reciprocal %28 {approx = true} : vector<4x8x1xf32> -> vector<4x8x1xf32>
    %30 = vector.broadcast %29 : vector<4x8x1xf32> to vector<4x8x8xf32>
    %31 = arith.mulf %26, %30 : vector<4x8x8xf32>
    "tpu.trace_start"() <{level = 10 : i32, message = "hts,hsd->htd"}> : () -> ()
    %cst_10 = arith.constant dense<0.000000e+00> : vector<4x8x8xf32>
    %32 = tpu.matmul %31, %20, %cst_10 {dimension_numbers = #tpu.dot_dimension_numbers<[2], [1], [1], [2], [0, 0, 0, 1, 1, 2], [0], [0]>} : vector<4x8x8xf32>, vector<4x8x8xf32>, vector<4x8x8xf32> -> vector<4x8x8xf32>
    "tpu.trace_stop"() : () -> ()
    %33 = tpu.transpose %32, [1, 0, 2] : vector<4x8x8xf32> -> vector<8x4x8xf32>
    %34 = vector.shape_cast %33 : vector<8x4x8xf32> to vector<8x32xf32>
    %35 = arith.truncf %34 : vector<8x32xf32> to vector<8x32xbf16>
    %c0_11 = arith.constant 0 : index
    %c0_12 = arith.constant 0 : index
    %36 = vector.load %arg4[%c0_11, %c0_12] : memref<32x32xbf16, #tpu.memory_space<vmem>>, vector<32x32xbf16>
    %cst_13 = arith.constant dense<0.000000e+00> : vector<8x32xf32>
    %37 = tpu.matmul %35, %36, %cst_13 {dimension_numbers = #tpu.dot_dimension_numbers<[1], [0], [0], [1], [0, 0, 1, 1], [], []>} : vector<8x32xbf16>, vector<32x32xbf16>, vector<8x32xf32> -> vector<8x32xf32>
    %c0_14 = arith.constant 0 : index
    %c0_15 = arith.constant 0 : index
    %38 = vector.load %arg5[%c0_14, %c0_15] : memref<1x32xf32, #tpu.memory_space<vmem>>, vector<1x32xf32>
    %39 = vector.shape_cast %38 : vector<1x32xf32> to vector<32xf32>
    %40 = vector.shape_cast %39 : vector<32xf32> to vector<1x32xf32>
    %41 = vector.broadcast %40 : vector<1x32xf32> to vector<8x32xf32>
    %42 = arith.addf %37, %41 : vector<8x32xf32>
    %c0_16 = arith.constant 0 : index
    %c0_17 = arith.constant 0 : index
    %c0_18 = arith.constant 0 : index
    %43 = vector.load %arg6[%c0_16, %c0_17, %c0_18] : memref<1x8x32xf32, #tpu.memory_space<vmem>>, vector<1x8x32xf32>
    %44 = vector.shape_cast %43 : vector<1x8x32xf32> to vector<8x32xf32>
    %45 = vector.shape_cast %42 : vector<8x32xf32> to vector<1x8x32xf32>
    tpu.vector_store %arg6[%c0_16, %c0_17, %c0_18], %45 {strides = array<i32>} : memref<1x8x32xf32, #tpu.memory_space<vmem>>, vector<1x8x32xf32>,
    return
  }
  func.func @transform_0(%arg0: i32) -> (i32, i32, i32) {
    %c0_i32 = arith.constant 0 : i32
    %c0_i32_0 = arith.constant 0 : i32
    %c0_i32_1 = arith.constant 0 : i32
    return %arg0, %c0_i32, %c0_i32_0 : i32, i32, i32
  }
  func.func @transform_1(%arg0: i32) -> (i32, i32) {
    %c0_i32 = arith.constant 0 : i32
    %c0_i32_0 = arith.constant 0 : i32
    %c0_i32_1 = arith.constant 0 : i32
    return %c0_i32, %c0_i32_0 : i32, i32
  }
  func.func @transform_2(%arg0: i32) -> (i32, i32) {
    %c0_i32 = arith.constant 0 : i32
    %c0_i32_0 = arith.constant 0 : i32
    %c0_i32_1 = arith.constant 0 : i32
    return %c0_i32, %c0_i32_0 : i32, i32
  }
  func.func @transform_3(%arg0: i32) -> (i32, i32) {
    %c0_i32 = arith.constant 0 : i32
    %c0_i32_0 = arith.constant 0 : i32
    %c0_i32_1 = arith.constant 0 : i32
    return %c0_i32, %c0_i32_0 : i32, i32
  }
  func.func @transform_4(%arg0: i32) -> (i32, i32) {
    %c0_i32 = arith.constant 0 : i32
    %c0_i32_0 = arith.constant 0 : i32
    %c0_i32_1 = arith.constant 0 : i32
    return %c0_i32, %c0_i32_0 : i32, i32
  }
  func.func @transform_5(%arg0: i32) -> (i32, i32, i32) {
    %c0_i32 = arith.constant 0 : i32
    %c0_i32_0 = arith.constant 0 : i32
    %c0_i32_1 = arith.constant 0 : i32
    return %arg0, %c0_i32, %c0_i32_0 : i32, i32, i32
  }
}

</mosaic_0001>

<llo_original>
// kernel: tpu_custom_call.1
$region0: #{tpu_custom_call.1}
  #allocation0 [shape = 'u32[]', space=smem, size = 0x4, offset = 0x4, fixed_abs, tag = 'smem constant byte address 0x4 - core index']
  #allocation1 [shape = 'u32[144,128]{1,0:T(1,128)}', space=vmem, size = 0x12000, scoped, tag = 'internal scratch']
  %s0 = inlined_call_operand.hbm [shape: f32[2,8,32], index: 0, kind: input, shape index: {}]
  %s1 = inlined_call_operand.hbm [shape: bf16[32,96], index: 1, kind: input, shape index: {}]
  %s2 = inlined_call_operand.vmem [shape: f32[1,96], index: 2, kind: input, shape index: {}]
  %s3 = inlined_call_operand.hbm [shape: bf16[32,32], index: 3, kind: input, shape index: {}]
  %s4 = inlined_call_operand.vmem [shape: f32[1,32], index: 4, kind: input, shape index: {}]
  %s5 = inlined_call_operand.hbm [shape: f32[2,8,32], index: 5, kind: output, shape index: {}]
  %s6 = sld [smem:[#allocation0]]
  $region65: #{tpu_custom_call.1} parent=0
    _
  %s8 = ssub.s32 1, %s6
  %s9 = scalar_select 0, %s8, %s6
  $region1: #{tpu_custom_call.1} parent=0
    #allocation2 [shape = 'u8[8192]{0}', space=vmem, size = 0x2000, scoped, tag = 'input window, operand 0']
    #allocation3 [shape = 's32[2]{0}', space=sflag, size = 0x8, scoped, tag = 'scoped memory for tpu_custom_call.1']
    #allocation4 [shape = 's32[2]{0}', space=sflag, size = 0x8, scoped, tag = 'scoped memory for tpu_custom_call.1']
    #allocation5 [shape = 'u8[8192]{0}', space=vmem, size = 0x2000, scoped, tag = 'input window, operand 1, single buffered']
    #allocation6 [shape = 's32[1]{0}', space=sflag, size = 0x4, scoped, tag = 'scoped memory for tpu_custom_call.1']
    #allocation7 [shape = 'u8[8192]{0}', space=vmem, size = 0x2000, scoped, tag = 'input window, operand 3, single buffered']
    #allocation8 [shape = 'u8[8192]{0}', space=vmem, size = 0x2000, scoped, tag = 'output window, operand 0']
    %10 = vsyncpa [#allocation3], 0
    %s11 = scalar_lea.sflag [#allocation3], 1
    %12 = vsyncpa %s11, 0
    %13 = vsyncpa [#allocation6], 0
    %14 = vsyncpa [#allocation4], 0
    %s15 = scalar_lea.sflag [#allocation4], 1
    %16 = vsyncpa %s15, 0
    loop: start=0, step=1, limit=4
    $region2: #{tpu_custom_call.1} parent=1 // loop_pre_header
      _
    $region3: #{tpu_custom_call.1} parent=1 // loop_header
      %s18 = sphi 0, %s22
      %p19 = scmp.ge.s32.totalorder %s18, 4
      %s28 = sphi 0, %s30
      %s31 = sphi 0, %s28
      %s32 = sphi 0, %s31
      %s48 = sphi 0, %s32
      %s52 = sphi 0, %s52
      %s54 = sphi 0, %s52
      %s55 = sphi 0, %s54
      %s69 = sphi 0, %s55
      %s73 = sphi 0, %s73
      %s75 = sphi 0, %s73
      %s76 = sphi 0, %s75
      %s90 = sphi 0, %s76
      %s94 = sphi 0, %s94
      %s96 = sphi 0, %s94
      %s97 = sphi 0, %s96
      %s111 = sphi 0, %s97
      %s115 = sphi 0, %s115
      %s117 = sphi 0, %s115
      %s118 = sphi 0, %s117
      %s132 = sphi 0, %s118
      %s138 = sphi 0, %s140
      %s141 = sphi 0, %s138
      %s142 = sphi 0, %s141
      %s158 = sphi 0, %s142
    $region4: #{tpu_custom_call.1} parent=1 // loop_header_branch
      %21 = sbr.rel (%p19) target = $region8
    $region5: #{tpu_custom_call.1} parent=1 // loop_body
      %s23 = ssub.s32 %s18, 1
      %s24 = ssub.s32 %s18, 2
      %s25 = sadd.s32 %s18, 1
      %s26 = ssub.s32 %s18, %s25
      %p27 = scmp.eq.s32.totalorder %s26, 0
      %s29 = sadd.s32 %s28, 1
      %s30 = scalar_select %p27, %s28, %s29
      %p33 = pneg %p27
      %p34 = scmp.eq.s32.totalorder %s18, 1
      %p35 = por %p33, %p34
      %p36 = scmp.ne.s32.totalorder %s28, %s31
      %p37 = scmp.eq.s32.totalorder %s18, 0
      %p38 = por %p36, %p37
      %p39 = scmp.ne.s32.totalorder %s28, %s31
      %p40 = scmp.eq.s32.totalorder %s23, 1
      %p41 = por %p39, %p40
      %p42 = scmp.ne.s32.totalorder %s31, %s32
      %p43 = scmp.eq.s32.totalorder %s23, 0
      %p44 = por %p42, %p43
      %p45 = scmp.ne.s32.totalorder %s31, %s32
      %p46 = scmp.eq.s32.totalorder %s24, 1
      %p47 = por %p45, %p46
      %p49 = scmp.ne.s32.totalorder %s32, %s48
      %p50 = scmp.eq.s32.totalorder %s24, 0
      %p51 = por %p49, %p50
      %s53 = sadd.s32 %s52, 1
      %p56 = scmp.eq.s32.totalorder %s18, 1
      %p57 = scmp.ne.s32.totalorder %s52, %s54
      %p58 = scmp.eq.s32.totalorder %s18, 0
      %p59 = por %p57, %p58
      %p60 = scmp.ne.s32.totalorder %s52, %s54
      %p61 = scmp.eq.s32.totalorder %s23, 1
      %p62 = por %p60, %p61
      %p63 = scmp.ne.s32.totalorder %s54, %s55
      %p64 = scmp.eq.s32.totalorder %s23, 0
      %p65 = por %p63, %p64
      %p66 = scmp.ne.s32.totalorder %s54, %s55
      %p67 = scmp.eq.s32.totalorder %s24, 1
      %p68 = por %p66, %p67
      %p70 = scmp.ne.s32.totalorder %s55, %s69
      %p71 = scmp.eq.s32.totalorder %s24, 0
      %p72 = por %p70, %p71
      %s74 = sadd.s32 %s73, 1
      %p77 = scmp.eq.s32.totalorder %s18, 1
      %p78 = scmp.ne.s32.totalorder %s73, %s75
      %p79 = scmp.eq.s32.totalorder %s18, 0
      %p80 = por %p78, %p79
      %p81 = scmp.ne.s32.totalorder %s73, %s75
      %p82 = scmp.eq.s32.totalorder %s23, 1
      %p83 = por %p81, %p82
      %p84 = scmp.ne.s32.totalorder %s75, %s76
      %p85 = scmp.eq.s32.totalorder %s23, 0
      %p86 = por %p84, %p85
      %p87 = scmp.ne.s32.totalorder %s75, %s76
      %p88 = scmp.eq.s32.totalorder %s24, 1
      %p89 = por %p87, %p88
      %p91 = scmp.ne.s32.totalorder %s76, %s90
      %p92 = scmp.eq.s32.totalorder %s24, 0
      %p93 = por %p91, %p92
      %s95 = sadd.s32 %s94, 1
      %p98 = scmp.eq.s32.totalorder %s18, 1
      %p99 = scmp.ne.s32.totalorder %s94, %s96
      %p100 = scmp.eq.s32.totalorder %s18, 0
      %p101 = por %p99, %p100
      %p102 = scmp.ne.s32.totalorder %s94, %s96
      %p103 = scmp.eq.s32.totalorder %s23, 1
      %p104 = por %p102, %p103
      %p105 = scmp.ne.s32.totalorder %s96, %s97
      %p106 = scmp.eq.s32.totalorder %s23, 0
      %p107 = por %p105, %p106
      %p108 = scmp.ne.s32.totalorder %s96, %s97
      %p109 = scmp.eq.s32.totalorder %s24, 1
      %p110 = por %p108, %p109
      %p112 = scmp.ne.s32.totalorder %s97, %s111
      %p113 = scmp.eq.s32.totalorder %s24, 0
      %p114 = por %p112, %p113
      %s116 = sadd.s32 %s115, 1
      %p119 = scmp.eq.s32.totalorder %s18, 1
      %p120 = scmp.ne.s32.totalorder %s115, %s117
      %p121 = scmp.eq.s32.totalorder %s18, 0
      %p122 = por %p120, %p121
      %p123 = scmp.ne.s32.totalorder %s115, %s117
      %p124 = scmp.eq.s32.totalorder %s23, 1
      %p125 = por %p123, %p124
      %p126 = scmp.ne.s32.totalorder %s117, %s118
      %p127 = scmp.eq.s32.totalorder %s23, 0
      %p128 = por %p126, %p127
      %p129 = scmp.ne.s32.totalorder %s117, %s118
      %p130 = scmp.eq.s32.totalorder %s24, 1
      %p131 = por %p129, %p130
      %p133 = scmp.ne.s32.totalorder %s118, %s132
      %p134 = scmp.eq.s32.totalorder %s24, 0
      %p135 = por %p133, %p134
      %s136 = ssub.s32 %s18, %s25
      %p137 = scmp.eq.s32.totalorder %s136, 0
      %s139 = sadd.s32 %s138, 1
      %s140 = scalar_select %p137, %s138, %s139
      %p143 = pneg %p137
      %p144 = scmp.eq.s32.totalorder %s18, 1
      %p145 = por %p143, %p144
      %p146 = scmp.ne.s32.totalorder %s138, %s141
      %p147 = scmp.eq.s32.totalorder %s18, 0
      %p148 = por %p146, %p147
      %p149 = scmp.ne.s32.totalorder %s138, %s141
      %p150 = scmp.eq.s32.totalorder %s23, 1
      %p151 = por %p149, %p150
      %p152 = scmp.ne.s32.totalorder %s141, %s142
      %p153 = scmp.eq.s32.totalorder %s23, 0
      %p154 = por %p152, %p153
      %p155 = scmp.ne.s32.totalorder %s141, %s142
      %p156 = scmp.eq.s32.totalorder %s24, 1
      %p157 = por %p155, %p156
      %p159 = scmp.ne.s32.totalorder %s142, %s158
      %p160 = scmp.eq.s32.totalorder %s24, 0
      %p161 = por %p159, %p160
      %p162 = scmp.le.s32.totalorder 1, %s18
      %p163 = scmp.lt.s32.totalorder %s18, 3
      %p164 = pnand %p162, %p163
      %p165 = pneg %p164
      // Predicated region
      $region9: #{tpu_custom_call.1} parent=5 // pred_check
        _
      $region10: #{tpu_custom_call.1} parent=5 // pred_check_branch
        %167 = sbr.rel (%p164) target = $region12
      $region11: #{tpu_custom_call.1} parent=5 // pred_region
        %s168 = ssub.s32 %s18, 1
        // Predicated region
        $region13: #{tpu_custom_call.1} parent=11 // pred_check
          %p169 = pneg %p65
        $region14: #{tpu_custom_call.1} parent=11 // pred_check_branch
          %171 = sbr.rel (%p169) target = $region16
        $region15: #{tpu_custom_call.1} parent=11 // pred_region
          %s173 = ssub.s32 256, 256
          %174 = vsyncadd [#allocation6], %s173
          %s175 = sshll.u32 [#allocation5], 4
          %s176 = int_to_ptr.vmem [resolvable:$true] %s175
          %181 = dma.hbm_to_vmem [thread:$0]  %s1, 256, %s176, [#allocation6], 64, 64, 4
        $region16: #{tpu_custom_call.1} parent=11 // pred_fallthru
          _
        // Predicated region
        $region17: #{tpu_custom_call.1} parent=11 // pred_check
          %p182 = pneg %p86
        $region18: #{tpu_custom_call.1} parent=11 // pred_check_branch
          %184 = sbr.rel (%p182) target = $region20
        $region19: #{tpu_custom_call.1} parent=11 // pred_region
          _
        $region20: #{tpu_custom_call.1} parent=11 // pred_fallthru
          _
        // Predicated region
        $region21: #{tpu_custom_call.1} parent=11 // pred_check
          %p185 = pneg %p107
        $region22: #{tpu_custom_call.1} parent=11 // pred_check_branch
          %187 = sbr.rel (%p185) target = $region24
        $region23: #{tpu_custom_call.1} parent=11 // pred_region
          %s189 = ssub.s32 256, 256
          %190 = vsyncadd [#allocation6], %s189
          %s191 = sshll.u32 [#allocation7], 4
          %s192 = int_to_ptr.vmem [resolvable:$true] %s191
          %197 = dma.hbm_to_vmem [thread:$0]  %s3, 256, %s192, [#allocation6], 64, 64, 4
        $region24: #{tpu_custom_call.1} parent=11 // pred_fallthru
          _
        // Predicated region
        $region25: #{tpu_custom_call.1} parent=11 // pred_check
          %p198 = pneg %p128
        $region26: #{tpu_custom_call.1} parent=11 // pred_check_branch
          %200 = sbr.rel (%p198) target = $region28
        $region27: #{tpu_custom_call.1} parent=11 // pred_region
          _
        $region28: #{tpu_custom_call.1} parent=11 // pred_fallthru
          _
      $region12: #{tpu_custom_call.1} parent=5 // pred_fallthru
        _
      %p201 = scmp.lt.s32.totalorder %s18, 2
      // Predicated region
      $region29: #{tpu_custom_call.1} parent=5 // pred_check
        %p202 = pneg %p201
      $region30: #{tpu_custom_call.1} parent=5 // pred_check_branch
        %204 = sbr.rel (%p202) target = $region32
      $region31: #{tpu_custom_call.1} parent=5 // pred_region
        // Predicated region
        $region33: #{tpu_custom_call.1} parent=31 // pred_check
          %p205 = pneg %p38
        $region34: #{tpu_custom_call.1} parent=31 // pred_check_branch
          %207 = sbr.rel (%p205) target = $region36
        $region35: #{tpu_custom_call.1} parent=31 // pred_region
          %s208 = sand.u32 %s28, 1
          %s209 = scalar_lea.sflag [#allocation3], %s208
          %s210 = sand.u32 %s28, 1
          %s211 = smul.addr %s210, 8
          %s212 = scalar_lea.vmem [#allocation2], %s211
          %s214 = ssub.s32 128, 128
          %215 = vsyncadd %s209, %s214
          %s216 = smul.addr %s18, 128
          %s217 = scalar_lea.hbm %s0, %s216
          %s219 = sshll.u32 %s212, 4
          %s220 = int_to_ptr.vmem [resolvable:$true] %s219
          %222 = dma.hbm_to_vmem [thread:$0]  %s217, 128, %s220, %s209
        $region36: #{tpu_custom_call.1} parent=31 // pred_fallthru
          _
      $region32: #{tpu_custom_call.1} parent=5 // pred_fallthru
        _
      %p223 = scmp.le.s32.totalorder 1, %s18
      %p224 = scmp.lt.s32.totalorder %s18, 3
      %p225 = pnand %p223, %p224
      %p226 = pneg %p225
      // Predicated region
      $region37: #{tpu_custom_call.1} parent=5 // pred_check
        _
      $region38: #{tpu_custom_call.1} parent=5 // pred_check_branch
        %228 = sbr.rel (%p225) target = $region40
      $region39: #{tpu_custom_call.1} parent=5 // pred_region
        %s229 = ssub.s32 %s18, 1
        %s230 = sand.u32 %s31, 1
        %s231 = scalar_lea.sflag [#allocation3], %s230
        %s232 = sand.u32 %s31, 1
        %s233 = smul.addr %s232, 8
        %s234 = scalar_lea.vmem [#allocation2], %s233
        // Predicated region
        $region41: #{tpu_custom_call.1} parent=39 // pred_check
          %p235 = pneg %p44
        $region42: #{tpu_custom_call.1} parent=39 // pred_check_branch
          %237 = sbr.rel (%p235) target = $region44
        $region43: #{tpu_custom_call.1} parent=39 // pred_region
          %238 = dma.done %s231, 128
        $region44: #{tpu_custom_call.1} parent=39 // pred_fallthru
          _
        // Predicated region
        $region45: #{tpu_custom_call.1} parent=39 // pred_check
          %p239 = pneg %p65
        $region46: #{tpu_custom_call.1} parent=39 // pred_check_branch
          %241 = sbr.rel (%p239) target = $region48
        $region47: #{tpu_custom_call.1} parent=39 // pred_region
          %242 = dma.done [#allocation6], 256
        $region48: #{tpu_custom_call.1} parent=39 // pred_fallthru
          _
        // Predicated region
        $region49: #{tpu_custom_call.1} parent=39 // pred_check
          %p243 = pneg %p107
        $region50: #{tpu_custom_call.1} parent=39 // pred_check_branch
          %245 = sbr.rel (%p243) target = $region52
        $region51: #{tpu_custom_call.1} parent=39 // pred_region
          %246 = dma.done [#allocation6], 256
        $region52: #{tpu_custom_call.1} parent=39 // pred_fallthru
          _
        %s247 = sand.u32 %s31, 1
        %s248 = scalar_lea.sflag [#allocation3], %s247
        %s249 = sand.u32 %s31, 1
        %s250 = smul.addr %s249, 8
        %s251 = scalar_lea.vmem [#allocation2], %s250
        %p252 = pneg %p44
        %p253 = pneg %p41
        %p254 = pneg %p65
        %p255 = pneg %p62
        %p256 = pneg %p86
        %p257 = pneg %p83
        %p258 = pneg %p107
        %p259 = pneg %p104
        %p260 = pneg %p128
        %p261 = pneg %p125
        %p262 = pneg %p154
        %p263 = pneg %p151
        %s264 = sand.u32 %s141, 1
        %s265 = scalar_lea.sflag [#allocation4], %s264
        %s266 = sand.u32 %s141, 1
        %s267 = smul.addr %s266, 8
        %s268 = scalar_lea.vmem [#allocation8], %s267
        %v270 = vld [vmem:[%s234] sm:$0xff]
        %v271 = vpack.c.bf16 %v270, %v270
        %v272 = vld [vmem:[#allocation5] sm:$0xf]
        %v273 = vld [vmem:[#allocation5 + $0x4] sm:$0xf]
        %v274 = vld [vmem:[#allocation5 + $0x8] sm:$0xf]
        %v275 = vld [vmem:[#allocation5 + $0xc] sm:$0xf]
        %v276 = vld [vmem:[%s2] sm:$0x1]
        %v278 = vlaneseq
        %v279 = vshrl.u32 %v278, 7
        %v280 = vsub.s32 0, %v279
        %v281 = vrot.slane %v276, %v280
        %v287 = vunpack.c.l.b16 %v272
        %v288 = vunpack.c.l.b16 %v273
        %v289 = vunpack.c.l.b16 %v274
        %v290 = vunpack.c.l.b16 %v275
        %v291 = vpack.c.b16 %v288, %v287
        %v292 = vpack.c.b16 %v290, %v289
        %vm295 = vcmask 261120
        %v297 = vsel %vm295, %v271, 0
        %299 = vmatprep.subr.bf16.mxu0 0
        %300 = vmatpush1.bf16.msra.mxu0 0
        %301 = vmatprep.subr.bf16.mxu0 0
        %302 = vmatpush1.bf16.msra.mxu0 0
        %303 = vmatprep.subr.bf16.mxu0 0
        %304 = vmatpush1.bf16.msra.mxu0 0
        %305 = vmatprep.subr.bf16.mxu0 0
        %306 = vmatpush1.bf16.msra.mxu0 0
        %307 = vmatprep.subr.bf16.mxu0 0
        %308 = vmatpush1.bf16.msra.mxu0 0
        %309 = vmatprep.subr.bf16.mxu0 0
        %310 = vmatpush1.bf16.msra.mxu0 0
        %311 = vmatprep.subr.bf16.mxu0 0
        %312 = vmatpush1.bf16.msra.mxu0 %v292
        %313 = vmatprep.subr.bf16.mxu0 0
        %314 = vmatpush1.bf16.msra.mxu0 %v291
        %315 = vmatprep.subr.bf16.mxu0 0
        %316 = vmatpush2.bf16.msra.mxu0 0
        %317 = vmatprep.subr.bf16.mxu0 0
        %318 = vmatpush2.bf16.msra.mxu0 0
        %319 = vmatprep.subr.bf16.mxu0 0
        %320 = vmatpush2.bf16.msra.mxu0 0
        %321 = vmatprep.subr.bf16.mxu0 0
        %322 = vmatpush2.bf16.msra.mxu0 0
        %323 = vmatprep.subr.bf16.mxu0 0
        %324 = vmatpush2.bf16.msra.mxu0 0
        %325 = vmatprep.subr.bf16.mxu0 0
        %326 = vmatpush2.bf16.msra.mxu0 0
        %327 = vmatprep.subr.bf16.mxu0 0
        %328 = vmatpush2.bf16.msra.mxu0 0
        %329 = vmatprep.subr.bf16.mxu0 0
        %330 = vmatpush2.bf16.msra.mxu0 0
        %331 = vmatprep.mubr.bf16.mxu0 0
        %332 = vmatmul.mubr.bf16.gmra.mxu0 %v297
        %v333 = vpop.f32.mrf.mxu0
        %v334 = vadd.f32 %v281, %v333
        %v335 = vpop.f32.mrf.mxu0
        %v336 = vpop.f32.mrf.mxu0
        %v337 = vpop.f32.mrf.mxu0
        %338 = vdwg.mxu0
        %340 = vrot.lane.b32.xlu0 %v334, 120
        %v341 = vpop.permute.xlu0 %340
        %343 = vrot.lane.b32.xlu0 %v334, 112
        %v344 = vpop.permute.xlu0 %343
        %346 = vrot.lane.b32.xlu0 %v334, 104
        %v347 = vpop.permute.xlu0 %346
        %v349 = vcombine.low %v334, %v344
        %v350 = vcombine.high %v334, %v344
        %v352 = vunpack.c.l.s4 1983009808
        %v353 = vunpack.c.0.s8 %v352
        %v354 = vlaneseq
        %v355 = vshrl.u32 %v354, 7
        %v356 = vsub.s32 %v353, %v355
        %v357 = vrot.slane %v349, %v356
        %v359 = vunpack.c.l.s4 1983009808
        %v360 = vunpack.c.0.s8 %v359
        %v361 = vlaneseq
        %v362 = vshrl.u32 %v361, 7
        %v363 = vsub.s32 %v360, %v362
        %v364 = vrot.slane %v350, %v363
        %v365 = vcombine.low %v341, %v347
        %v366 = vcombine.high %v341, %v347
        %v368 = vunpack.c.l.s4 1983009808
        %v369 = vunpack.c.0.s8 %v368
        %v370 = vlaneseq
        %v371 = vshrl.u32 %v370, 7
        %v372 = vsub.s32 %v369, %v371
        %v373 = vrot.slane %v365, %v372
        %v375 = vunpack.c.l.s4 1983009808
        %v376 = vunpack.c.0.s8 %v375
        %v377 = vlaneseq
        %v378 = vshrl.u32 %v377, 7
        %v379 = vsub.s32 %v376, %v378
        %v380 = vrot.slane %v366, %v379
        %v381 = vcombine.low %v357, %v373
        %v382 = vcombine.high %v357, %v373
        %v384 = vunpack.c.l.s4 1934713408
        %v385 = vunpack.c.0.s8 %v384
        %v386 = vlaneseq
        %v387 = vshrl.u32 %v386, 7
        %v388 = vsub.s32 %v385, %v387
        %v389 = vrot.slane %v381, %v388
        %v391 = vunpack.c.l.s4 1934713408
        %v392 = vunpack.c.0.s8 %v391
        %v393 = vlaneseq
        %v394 = vshrl.u32 %v393, 7
        %v395 = vsub.s32 %v392, %v394
        %v396 = vrot.slane %v382, %v395
        %v397 = vcombine.low %v364, %v380
        %v398 = vcombine.high %v364, %v380
        %v400 = vunpack.c.l.s4 1934713408
        %v401 = vunpack.c.0.s8 %v400
        %v402 = vlaneseq
        %v403 = vshrl.u32 %v402, 7
        %v404 = vsub.s32 %v401, %v403
        %v405 = vrot.slane %v397, %v404
        %v407 = vunpack.c.l.s4 1934713408
        %v408 = vunpack.c.0.s8 %v407
        %v409 = vlaneseq
        %v410 = vshrl.u32 %v409, 7
        %v411 = vsub.s32 %v408, %v410
        %v412 = vrot.slane %v398, %v411
        %v413 = vcombine.high %v389, 0.0
        %v414 = vcombine.high %v396, 0.0
        %v415 = vcombine.high %v405, 0.0
        %v416 = vcombine.high %v412, 0.0
        %v417 = vcombine.low %v389, %v396
        %v419 = vunpack.c.l.s4 1983009808
        %v420 = vunpack.c.0.s8 %v419
        %v421 = vlaneseq
        %v422 = vshrl.u32 %v421, 7
        %v423 = vsub.s32 %v420, %v422
        %v424 = vrot.slane %v417, %v423
        %v425 = vcombine.low %v413, %v414
        %v427 = vunpack.c.l.s4 1983009808
        %v428 = vunpack.c.0.s8 %v427
        %v429 = vlaneseq
        %v430 = vshrl.u32 %v429, 7
        %v431 = vsub.s32 %v428, %v430
        %v432 = vrot.slane %v425, %v431
        %v433 = vcombine.low %v405, %v412
        %v435 = vunpack.c.l.s4 1983009808
        %v436 = vunpack.c.0.s8 %v435
        %v437 = vlaneseq
        %v438 = vshrl.u32 %v437, 7
        %v439 = vsub.s32 %v436, %v438
        %v440 = vrot.slane %v433, %v439
        %v441 = vcombine.low %v415, %v416
        %v443 = vunpack.c.l.s4 1983009808
        %v444 = vunpack.c.0.s8 %v443
        %v445 = vlaneseq
        %v446 = vshrl.u32 %v445, 7
        %v447 = vsub.s32 %v444, %v446
        %v448 = vrot.slane %v441, %v447
        %v449 = vcombine.low %v424, %v432
        %v450 = vcombine.high %v424, %v432
        %v452 = vunpack.c.l.s4 1934713408
        %v453 = vunpack.c.0.s8 %v452
        %v454 = vlaneseq
        %v455 = vshrl.u32 %v454, 7
        %v456 = vsub.s32 %v453, %v455
        %v457 = vrot.slane %v449, %v456
        %v459 = vunpack.c.l.s4 1934713408
        %v460 = vunpack.c.0.s8 %v459
        %v461 = vlaneseq
        %v462 = vshrl.u32 %v461, 7
        %v463 = vsub.s32 %v460, %v462
        %v464 = vrot.slane %v450, %v463
        %v465 = vcombine.low %v440, %v448
        %v466 = vcombine.high %v440, %v448
        %v468 = vunpack.c.l.s4 1934713408
        %v469 = vunpack.c.0.s8 %v468
        %v470 = vlaneseq
        %v471 = vshrl.u32 %v470, 7
        %v472 = vsub.s32 %v469, %v471
        %v473 = vrot.slane %v465, %v472
        %v475 = vunpack.c.l.s4 1934713408
        %v476 = vunpack.c.0.s8 %v475
        %v477 = vlaneseq
        %v478 = vshrl.u32 %v477, 7
        %v479 = vsub.s32 %v476, %v478
        %v480 = vrot.slane %v466, %v479
        %v481 = vcombine.low %v457, %v473
        %v482 = vcombine.high %v457, %v473
        %v483 = vcombine.low %v464, %v480
        %v484 = vcombine.high %v464, %v480
        %v485 = vmul.f32 %v481, 0.35355338
        %v486 = vmul.f32 %v482, 0.35355338
        %v487 = vmul.f32 %v483, 0.35355338
        %v488 = vmul.f32 %v484, 0.35355338
        %489 = vrot.lane.b32.xlu0 %v334, 96
        %v490 = vpop.permute.xlu0 %489
        %491 = vrot.lane.b32.xlu0 %v341, 96
        %v492 = vpop.permute.xlu0 %491
        %493 = vrot.lane.b32.xlu0 %v344, 96
        %v494 = vpop.permute.xlu0 %493
        %495 = vrot.lane.b32.xlu0 %v347, 96
        %v496 = vpop.permute.xlu0 %495
        %v501 = vcombine.low %v490, %v494
        %v502 = vcombine.high %v490, %v494
        %v504 = vunpack.c.l.s4 1983009808
        %v505 = vunpack.c.0.s8 %v504
        %v506 = vlaneseq
        %v507 = vshrl.u32 %v506, 7
        %v508 = vsub.s32 %v505, %v507
        %v509 = vrot.slane %v501, %v508
        %v511 = vunpack.c.l.s4 1983009808
        %v512 = vunpack.c.0.s8 %v511
        %v513 = vlaneseq
        %v514 = vshrl.u32 %v513, 7
        %v515 = vsub.s32 %v512, %v514
        %v516 = vrot.slane %v502, %v515
        %v517 = vcombine.low %v492, %v496
        %v518 = vcombine.high %v492, %v496
        %v520 = vunpack.c.l.s4 1983009808
        %v521 = vunpack.c.0.s8 %v520
        %v522 = vlaneseq
        %v523 = vshrl.u32 %v522, 7
        %v524 = vsub.s32 %v521, %v523
        %v525 = vrot.slane %v517, %v524
        %v527 = vunpack.c.l.s4 1983009808
        %v528 = vunpack.c.0.s8 %v527
        %v529 = vlaneseq
        %v530 = vshrl.u32 %v529, 7
        %v531 = vsub.s32 %v528, %v530
        %v532 = vrot.slane %v518, %v531
        %v533 = vcombine.low %v509, %v525
        %v534 = vcombine.high %v509, %v525
        %v536 = vunpack.c.l.s4 1934713408
        %v537 = vunpack.c.0.s8 %v536
        %v538 = vlaneseq
        %v539 = vshrl.u32 %v538, 7
        %v540 = vsub.s32 %v537, %v539
        %v541 = vrot.slane %v533, %v540
        %v543 = vunpack.c.l.s4 1934713408
        %v544 = vunpack.c.0.s8 %v543
        %v545 = vlaneseq
        %v546 = vshrl.u32 %v545, 7
        %v547 = vsub.s32 %v544, %v546
        %v548 = vrot.slane %v534, %v547
        %v549 = vcombine.low %v516, %v532
        %v550 = vcombine.high %v516, %v532
        %v552 = vunpack.c.l.s4 1934713408
        %v553 = vunpack.c.0.s8 %v552
        %v554 = vlaneseq
        %v555 = vshrl.u32 %v554, 7
        %v556 = vsub.s32 %v553, %v555
        %v557 = vrot.slane %v549, %v556
        %v559 = vunpack.c.l.s4 1934713408
        %v560 = vunpack.c.0.s8 %v559
        %v561 = vlaneseq
        %v562 = vshrl.u32 %v561, 7
        %v563 = vsub.s32 %v560, %v562
        %v564 = vrot.slane %v550, %v563
        %v565 = vcombine.high %v541, 0.0
        %v566 = vcombine.high %v548, 0.0
        %v567 = vcombine.high %v557, 0.0
        %v568 = vcombine.high %v564, 0.0
        %v569 = vcombine.low %v541, %v548
        %v571 = vunpack.c.l.s4 1983009808
        %v572 = vunpack.c.0.s8 %v571
        %v573 = vlaneseq
        %v574 = vshrl.u32 %v573, 7
        %v575 = vsub.s32 %v572, %v574
        %v576 = vrot.slane %v569, %v575
        %v577 = vcombine.low %v565, %v566
        %v579 = vunpack.c.l.s4 1983009808
        %v580 = vunpack.c.0.s8 %v579
        %v581 = vlaneseq
        %v582 = vshrl.u32 %v581, 7
        %v583 = vsub.s32 %v580, %v582
        %v584 = vrot.slane %v577, %v583
        %v585 = vcombine.low %v557, %v564
        %v587 = vunpack.c.l.s4 1983009808
        %v588 = vunpack.c.0.s8 %v587
        %v589 = vlaneseq
        %v590 = vshrl.u32 %v589, 7
        %v591 = vsub.s32 %v588, %v590
        %v592 = vrot.slane %v585, %v591
        %v593 = vcombine.low %v567, %v568
        %v595 = vunpack.c.l.s4 1983009808
        %v596 = vunpack.c.0.s8 %v595
        %v597 = vlaneseq
        %v598 = vshrl.u32 %v597, 7
        %v599 = vsub.s32 %v596, %v598
        %v600 = vrot.slane %v593, %v599
        %v601 = vcombine.low %v576, %v584
        %v602 = vcombine.high %v576, %v584
        %v604 = vunpack.c.l.s4 1934713408
        %v605 = vunpack.c.0.s8 %v604
        %v606 = vlaneseq
        %v607 = vshrl.u32 %v606, 7
        %v608 = vsub.s32 %v605, %v607
        %v609 = vrot.slane %v601, %v608
        %v611 = vunpack.c.l.s4 1934713408
        %v612 = vunpack.c.0.s8 %v611
        %v613 = vlaneseq
        %v614 = vshrl.u32 %v613, 7
        %v615 = vsub.s32 %v612, %v614
        %v616 = vrot.slane %v602, %v615
        %v617 = vcombine.low %v592, %v600
        %v618 = vcombine.high %v592, %v600
        %v620 = vunpack.c.l.s4 1934713408
        %v621 = vunpack.c.0.s8 %v620
        %v622 = vlaneseq
        %v623 = vshrl.u32 %v622, 7
        %v624 = vsub.s32 %v621, %v623
        %v625 = vrot.slane %v617, %v624
        %v627 = vunpack.c.l.s4 1934713408
        %v628 = vunpack.c.0.s8 %v627
        %v629 = vlaneseq
        %v630 = vshrl.u32 %v629, 7
        %v631 = vsub.s32 %v628, %v630
        %v632 = vrot.slane %v618, %v631
        %v633 = vcombine.low %v609, %v625
        %v634 = vcombine.high %v609, %v625
        %v635 = vcombine.low %v616, %v632
        %v636 = vcombine.high %v616, %v632
        %637 = vrot.lane.b32.xlu0 %v334, 64
        %v638 = vpop.permute.xlu0 %637
        %639 = vrot.lane.b32.xlu0 %v341, 64
        %v640 = vpop.permute.xlu0 %639
        %641 = vrot.lane.b32.xlu0 %v344, 64
        %v642 = vpop.permute.xlu0 %641
        %643 = vrot.lane.b32.xlu0 %v347, 64
        %v644 = vpop.permute.xlu0 %643
        %v649 = vcombine.low %v638, %v642
        %v650 = vcombine.high %v638, %v642
        %v652 = vunpack.c.l.s4 1983009808
        %v653 = vunpack.c.0.s8 %v652
        %v654 = vlaneseq
        %v655 = vshrl.u32 %v654, 7
        %v656 = vsub.s32 %v653, %v655
        %v657 = vrot.slane %v649, %v656
        %v659 = vunpack.c.l.s4 1983009808
        %v660 = vunpack.c.0.s8 %v659
        %v661 = vlaneseq
        %v662 = vshrl.u32 %v661, 7
        %v663 = vsub.s32 %v660, %v662
        %v664 = vrot.slane %v650, %v663
        %v665 = vcombine.low %v640, %v644
        %v666 = vcombine.high %v640, %v644
        %v668 = vunpack.c.l.s4 1983009808
        %v669 = vunpack.c.0.s8 %v668
        %v670 = vlaneseq
        %v671 = vshrl.u32 %v670, 7
        %v672 = vsub.s32 %v669, %v671
        %v673 = vrot.slane %v665, %v672
        %v675 = vunpack.c.l.s4 1983009808
        %v676 = vunpack.c.0.s8 %v675
        %v677 = vlaneseq
        %v678 = vshrl.u32 %v677, 7
        %v679 = vsub.s32 %v676, %v678
        %v680 = vrot.slane %v666, %v679
        %v681 = vcombine.low %v657, %v673
        %v682 = vcombine.high %v657, %v673
        %v684 = vunpack.c.l.s4 1934713408
        %v685 = vunpack.c.0.s8 %v684
        %v686 = vlaneseq
        %v687 = vshrl.u32 %v686, 7
        %v688 = vsub.s32 %v685, %v687
        %v689 = vrot.slane %v681, %v688
        %v691 = vunpack.c.l.s4 1934713408
        %v692 = vunpack.c.0.s8 %v691
        %v693 = vlaneseq
        %v694 = vshrl.u32 %v693, 7
        %v695 = vsub.s32 %v692, %v694
        %v696 = vrot.slane %v682, %v695
        %v697 = vcombine.low %v664, %v680
        %v698 = vcombine.high %v664, %v680
        %v700 = vunpack.c.l.s4 1934713408
        %v701 = vunpack.c.0.s8 %v700
        %v702 = vlaneseq
        %v703 = vshrl.u32 %v702, 7
        %v704 = vsub.s32 %v701, %v703
        %v705 = vrot.slane %v697, %v704
        %v707 = vunpack.c.l.s4 1934713408
        %v708 = vunpack.c.0.s8 %v707
        %v709 = vlaneseq
        %v710 = vshrl.u32 %v709, 7
        %v711 = vsub.s32 %v708, %v710
        %v712 = vrot.slane %v698, %v711
        %v713 = vcombine.high %v689, 0.0
        %v714 = vcombine.high %v696, 0.0
        %v715 = vcombine.high %v705, 0.0
        %v716 = vcombine.high %v712, 0.0
        %v717 = vcombine.low %v689, %v696
        %v719 = vunpack.c.l.s4 1983009808
        %v720 = vunpack.c.0.s8 %v719
        %v721 = vlaneseq
        %v722 = vshrl.u32 %v721, 7
        %v723 = vsub.s32 %v720, %v722
        %v724 = vrot.slane %v717, %v723
        %v725 = vcombine.low %v713, %v714
        %v727 = vunpack.c.l.s4 1983009808
        %v728 = vunpack.c.0.s8 %v727
        %v729 = vlaneseq
        %v730 = vshrl.u32 %v729, 7
        %v731 = vsub.s32 %v728, %v730
        %v732 = vrot.slane %v725, %v731
        %v733 = vcombine.low %v705, %v712
        %v735 = vunpack.c.l.s4 1983009808
        %v736 = vunpack.c.0.s8 %v735
        %v737 = vlaneseq
        %v738 = vshrl.u32 %v737, 7
        %v739 = vsub.s32 %v736, %v738
        %v740 = vrot.slane %v733, %v739
        %v741 = vcombine.low %v715, %v716
        %v743 = vunpack.c.l.s4 1983009808
        %v744 = vunpack.c.0.s8 %v743
        %v745 = vlaneseq
        %v746 = vshrl.u32 %v745, 7
        %v747 = vsub.s32 %v744, %v746
        %v748 = vrot.slane %v741, %v747
        %v749 = vcombine.low %v724, %v732
        %v750 = vcombine.high %v724, %v732
        %v752 = vunpack.c.l.s4 1934713408
        %v753 = vunpack.c.0.s8 %v752
        %v754 = vlaneseq
        %v755 = vshrl.u32 %v754, 7
        %v756 = vsub.s32 %v753, %v755
        %v757 = vrot.slane %v749, %v756
        %v759 = vunpack.c.l.s4 1934713408
        %v760 = vunpack.c.0.s8 %v759
        %v761 = vlaneseq
        %v762 = vshrl.u32 %v761, 7
        %v763 = vsub.s32 %v760, %v762
        %v764 = vrot.slane %v750, %v763
        %v765 = vcombine.low %v740, %v748
        %v766 = vcombine.high %v740, %v748
        %v768 = vunpack.c.l.s4 1934713408
        %v769 = vunpack.c.0.s8 %v768
        %v770 = vlaneseq
        %v771 = vshrl.u32 %v770, 7
        %v772 = vsub.s32 %v769, %v771
        %v773 = vrot.slane %v765, %v772
        %v775 = vunpack.c.l.s4 1934713408
        %v776 = vunpack.c.0.s8 %v775
        %v777 = vlaneseq
        %v778 = vshrl.u32 %v777, 7
        %v779 = vsub.s32 %v776, %v778
        %v780 = vrot.slane %v766, %v779
        %v781 = vcombine.low %v757, %v773
        %v782 = vcombine.high %v757, %v773
        %v783 = vcombine.low %v764, %v780
        %v784 = vcombine.high %v764, %v780
        %vm785 = vcmask 64512
        %v787 = vsel %vm785, %v485, 0
        %v790 = vsel %vm785, %v633, 0
        %792 = vmatprep.subr.mxu0 0.0
        %793 = vmatpush1.xpose.msra.mxu0 0.0
        %794 = vmatprep.subr.mxu0 0.0
        %795 = vmatpush1.xpose.msra.mxu0 0.0
        %796 = vmatprep.subr.mxu0 0.0
        %797 = vmatpush1.xpose.msra.mxu0 0.0
        %798 = vmatprep.subr.mxu0 0.0
        %799 = vmatpush1.xpose.msra.mxu0 0.0
        %800 = vmatprep.subr.mxu0 0.0
        %801 = vmatpush1.xpose.msra.mxu0 0.0
        %802 = vmatprep.subr.mxu0 0.0
        %803 = vmatpush1.xpose.msra.mxu0 0.0
        %804 = vmatprep.subr.mxu0 0.0
        %805 = vmatpush1.xpose.msra.mxu0 0.0
        %806 = vmatprep.subr.mxu0 0.0
        %807 = vmatpush1.xpose.msra.mxu0 0.0
        %808 = vmatprep.subr.mxu0 0.0
        %809 = vmatpush1.xpose.msra.mxu0 0.0
        %810 = vmatprep.subr.mxu0 0.0
        %811 = vmatpush1.xpose.msra.mxu0 0.0
        %812 = vmatprep.subr.mxu0 0.0
        %813 = vmatpush1.xpose.msra.mxu0 0.0
        %814 = vmatprep.subr.mxu0 0.0
        %815 = vmatpush1.xpose.msra.mxu0 0.0
        %816 = vmatprep.subr.mxu0 0.0
        %817 = vmatpush1.xpose.msra.mxu0 0.0
        %818 = vmatprep.subr.mxu0 0.0
        %819 = vmatpush1.xpose.msra.mxu0 0.0
        %820 = vmatprep.subr.mxu0 0.0
        %821 = vmatpush1.xpose.msra.mxu0 0.0
        %822 = vmatprep.subr.mxu0 0.0
        %823 = vmatpush1.xpose.msra.mxu0 %v790
        %824 = vmatprep.subr.mxu0 0.0
        %825 = vmatpush2.xpose.msra.mxu0 0.0
        %826 = vmatprep.subr.mxu0 0.0
        %827 = vmatpush2.xpose.msra.mxu0 0.0
        %828 = vmatprep.subr.mxu0 0.0
        %829 = vmatpush2.xpose.msra.mxu0 0.0
        %830 = vmatprep.subr.mxu0 0.0
        %831 = vmatpush2.xpose.msra.mxu0 0.0
        %832 = vmatprep.subr.mxu0 0.0
        %833 = vmatpush2.xpose.msra.mxu0 0.0
        %834 = vmatprep.subr.mxu0 0.0
        %835 = vmatpush2.xpose.msra.mxu0 0.0
        %836 = vmatprep.subr.mxu0 0.0
        %837 = vmatpush2.xpose.msra.mxu0 0.0
        %838 = vmatprep.subr.mxu0 0.0
        %839 = vmatpush2.xpose.msra.mxu0 0.0
        %840 = vmatprep.subr.mxu0 0.0
        %841 = vmatpush2.xpose.msra.mxu0 0.0
        %842 = vmatprep.subr.mxu0 0.0
        %843 = vmatpush2.xpose.msra.mxu0 0.0
        %844 = vmatprep.subr.mxu0 0.0
        %845 = vmatpush2.xpose.msra.mxu0 0.0
        %846 = vmatprep.subr.mxu0 0.0
        %847 = vmatpush2.xpose.msra.mxu0 0.0
        %848 = vmatprep.subr.mxu0 0.0
        %849 = vmatpush2.xpose.msra.mxu0 0.0
        %850 = vmatprep.subr.mxu0 0.0
        %851 = vmatpush2.xpose.msra.mxu0 0.0
        %852 = vmatprep.subr.mxu0 0.0
        %853 = vmatpush2.xpose.msra.mxu0 0.0
        %854 = vmatprep.subr.mxu0 0.0
        %855 = vmatpush2.xpose.msra.mxu0 0.0
        %856 = vmatprep.mubr.f32.mxu0 0.0
        %857 = vmatmul.mubr.f32.gmra.mxu0 %v787
        %v858 = vpop.f32.mrf.mxu0
        %v859 = vadd.f32 0.0, %v858
        %v860 = vpop.f32.mrf.mxu0
        %861 = vdwg.mxu0
        %v863 = vsel %vm785, %v486, 0
        %v866 = vsel %vm785, %v634, 0
        %868 = vmatprep.subr.mxu0 0.0
        %869 = vmatpush1.xpose.msra.mxu0 0.0
        %870 = vmatprep.subr.mxu0 0.0
        %871 = vmatpush1.xpose.msra.mxu0 0.0
        %872 = vmatprep.subr.mxu0 0.0
        %873 = vmatpush1.xpose.msra.mxu0 0.0
        %874 = vmatprep.subr.mxu0 0.0
        %875 = vmatpush1.xpose.msra.mxu0 0.0
        %876 = vmatprep.subr.mxu0 0.0
        %877 = vmatpush1.xpose.msra.mxu0 0.0
        %878 = vmatprep.subr.mxu0 0.0
        %879 = vmatpush1.xpose.msra.mxu0 0.0
        %880 = vmatprep.subr.mxu0 0.0
        %881 = vmatpush1.xpose.msra.mxu0 0.0
        %882 = vmatprep.subr.mxu0 0.0
        %883 = vmatpush1.xpose.msra.mxu0 0.0
        %884 = vmatprep.subr.mxu0 0.0
        %885 = vmatpush1.xpose.msra.mxu0 0.0
        %886 = vmatprep.subr.mxu0 0.0
        %887 = vmatpush1.xpose.msra.mxu0 0.0
        %888 = vmatprep.subr.mxu0 0.0
        %889 = vmatpush1.xpose.msra.mxu0 0.0
        %890 = vmatprep.subr.mxu0 0.0
        %891 = vmatpush1.xpose.msra.mxu0 0.0
        %892 = vmatprep.subr.mxu0 0.0
        %893 = vmatpush1.xpose.msra.mxu0 0.0
        %894 = vmatprep.subr.mxu0 0.0
        %895 = vmatpush1.xpose.msra.mxu0 0.0
        %896 = vmatprep.subr.mxu0 0.0
        %897 = vmatpush1.xpose.msra.mxu0 0.0
        %898 = vmatprep.subr.mxu0 0.0
        %899 = vmatpush1.xpose.msra.mxu0 %v866
        %900 = vmatprep.subr.mxu0 0.0
        %901 = vmatpush2.xpose.msra.mxu0 0.0
        %902 = vmatprep.subr.mxu0 0.0
        %903 = vmatpush2.xpose.msra.mxu0 0.0
        %904 = vmatprep.subr.mxu0 0.0
        %905 = vmatpush2.xpose.msra.mxu0 0.0
        %906 = vmatprep.subr.mxu0 0.0
        %907 = vmatpush2.xpose.msra.mxu0 0.0
        %908 = vmatprep.subr.mxu0 0.0
        %909 = vmatpush2.xpose.msra.mxu0 0.0
        %910 = vmatprep.subr.mxu0 0.0
        %911 = vmatpush2.xpose.msra.mxu0 0.0
        %912 = vmatprep.subr.mxu0 0.0
        %913 = vmatpush2.xpose.msra.mxu0 0.0
        %914 = vmatprep.subr.mxu0 0.0
        %915 = vmatpush2.xpose.msra.mxu0 0.0
        %916 = vmatprep.subr.mxu0 0.0
        %917 = vmatpush2.xpose.msra.mxu0 0.0
        %918 = vmatprep.subr.mxu0 0.0
        %919 = vmatpush2.xpose.msra.mxu0 0.0
        %920 = vmatprep.subr.mxu0 0.0
        %921 = vmatpush2.xpose.msra.mxu0 0.0
        %922 = vmatprep.subr.mxu0 0.0
        %923 = vmatpush2.xpose.msra.mxu0 0.0
        %924 = vmatprep.subr.mxu0 0.0
        %925 = vmatpush2.xpose.msra.mxu0 0.0
        %926 = vmatprep.subr.mxu0 0.0
        %927 = vmatpush2.xpose.msra.mxu0 0.0
        %928 = vmatprep.subr.mxu0 0.0
        %929 = vmatpush2.xpose.msra.mxu0 0.0
        %930 = vmatprep.subr.mxu0 0.0
        %931 = vmatpush2.xpose.msra.mxu0 0.0
        %932 = vmatprep.mubr.f32.mxu0 0.0
        %933 = vmatmul.mubr.f32.gmra.mxu0 %v863
        %v934 = vpop.f32.mrf.mxu0
        %v935 = vadd.f32 0.0, %v934
        %v936 = vpop.f32.mrf.mxu0
        %937 = vdwg.mxu0
        %v939 = vsel %vm785, %v487, 0
        %v942 = vsel %vm785, %v635, 0
        %944 = vmatprep.subr.mxu0 0.0
        %945 = vmatpush1.xpose.msra.mxu0 0.0
        %946 = vmatprep.subr.mxu0 0.0
        %947 = vmatpush1.xpose.msra.mxu0 0.0
        %948 = vmatprep.subr.mxu0 0.0
        %949 = vmatpush1.xpose.msra.mxu0 0.0
        %950 = vmatprep.subr.mxu0 0.0
        %951 = vmatpush1.xpose.msra.mxu0 0.0
        %952 = vmatprep.subr.mxu0 0.0
        %953 = vmatpush1.xpose.msra.mxu0 0.0
        %954 = vmatprep.subr.mxu0 0.0
        %955 = vmatpush1.xpose.msra.mxu0 0.0
        %956 = vmatprep.subr.mxu0 0.0
        %957 = vmatpush1.xpose.msra.mxu0 0.0
        %958 = vmatprep.subr.mxu0 0.0
        %959 = vmatpush1.xpose.msra.mxu0 0.0
        %960 = vmatprep.subr.mxu0 0.0
        %961 = vmatpush1.xpose.msra.mxu0 0.0
        %962 = vmatprep.subr.mxu0 0.0
        %963 = vmatpush1.xpose.msra.mxu0 0.0
        %964 = vmatprep.subr.mxu0 0.0
        %965 = vmatpush1.xpose.msra.mxu0 0.0
        %966 = vmatprep.subr.mxu0 0.0
        %967 = vmatpush1.xpose.msra.mxu0 0.0
        %968 = vmatprep.subr.mxu0 0.0
        %969 = vmatpush1.xpose.msra.mxu0 0.0
        %970 = vmatprep.subr.mxu0 0.0
        %971 = vmatpush1.xpose.msra.mxu0 0.0
        %972 = vmatprep.subr.mxu0 0.0
        %973 = vmatpush1.xpose.msra.mxu0 0.0
        %974 = vmatprep.subr.mxu0 0.0
        %975 = vmatpush1.xpose.msra.mxu0 %v942
        %976 = vmatprep.subr.mxu0 0.0
        %977 = vmatpush2.xpose.msra.mxu0 0.0
        %978 = vmatprep.subr.mxu0 0.0
        %979 = vmatpush2.xpose.msra.mxu0 0.0
        %980 = vmatprep.subr.mxu0 0.0
        %981 = vmatpush2.xpose.msra.mxu0 0.0
        %982 = vmatprep.subr.mxu0 0.0
        %983 = vmatpush2.xpose.msra.mxu0 0.0
        %984 = vmatprep.subr.mxu0 0.0
        %985 = vmatpush2.xpose.msra.mxu0 0.0
        %986 = vmatprep.subr.mxu0 0.0
        %987 = vmatpush2.xpose.msra.mxu0 0.0
        %988 = vmatprep.subr.mxu0 0.0
        %989 = vmatpush2.xpose.msra.mxu0 0.0
        %990 = vmatprep.subr.mxu0 0.0
        %991 = vmatpush2.xpose.msra.mxu0 0.0
        %992 = vmatprep.subr.mxu0 0.0
        %993 = vmatpush2.xpose.msra.mxu0 0.0
        %994 = vmatprep.subr.mxu0 0.0
        %995 = vmatpush2.xpose.msra.mxu0 0.0
        %996 = vmatprep.subr.mxu0 0.0
        %997 = vmatpush2.xpose.msra.mxu0 0.0
        %998 = vmatprep.subr.mxu0 0.0
        %999 = vmatpush2.xpose.msra.mxu0 0.0
        %1000 = vmatprep.subr.mxu0 0.0
        %1001 = vmatpush2.xpose.msra.mxu0 0.0
        %1002 = vmatprep.subr.mxu0 0.0
        %1003 = vmatpush2.xpose.msra.mxu0 0.0
        %1004 = vmatprep.subr.mxu0 0.0
        %1005 = vmatpush2.xpose.msra.mxu0 0.0
        %1006 = vmatprep.subr.mxu0 0.0
        %1007 = vmatpush2.xpose.msra.mxu0 0.0
        %1008 = vmatprep.mubr.f32.mxu0 0.0
        %1009 = vmatmul.mubr.f32.gmra.mxu0 %v939
        %v1010 = vpop.f32.mrf.mxu0
        %v1011 = vadd.f32 0.0, %v1010
        %v1012 = vpop.f32.mrf.mxu0
        %1013 = vdwg.mxu0
        %v1015 = vsel %vm785, %v488, 0
        %v1018 = vsel %vm785, %v636, 0
        %1020 = vmatprep.subr.mxu0 0.0
        %1021 = vmatpush1.xpose.msra.mxu0 0.0
        %1022 = vmatprep.subr.mxu0 0.0
        %1023 = vmatpush1.xpose.msra.mxu0 0.0
        %1024 = vmatprep.subr.mxu0 0.0
        %1025 = vmatpush1.xpose.msra.mxu0 0.0
        %1026 = vmatprep.subr.mxu0 0.0
        %1027 = vmatpush1.xpose.msra.mxu0 0.0
        %1028 = vmatprep.subr.mxu0 0.0
        %1029 = vmatpush1.xpose.msra.mxu0 0.0
        %1030 = vmatprep.subr.mxu0 0.0
        %1031 = vmatpush1.xpose.msra.mxu0 0.0
        %1032 = vmatprep.subr.mxu0 0.0
        %1033 = vmatpush1.xpose.msra.mxu0 0.0
        %1034 = vmatprep.subr.mxu0 0.0
        %1035 = vmatpush1.xpose.msra.mxu0 0.0
        %1036 = vmatprep.subr.mxu0 0.0
        %1037 = vmatpush1.xpose.msra.mxu0 0.0
        %1038 = vmatprep.subr.mxu0 0.0
        %1039 = vmatpush1.xpose.msra.mxu0 0.0
        %1040 = vmatprep.subr.mxu0 0.0
        %1041 = vmatpush1.xpose.msra.mxu0 0.0
        %1042 = vmatprep.subr.mxu0 0.0
        %1043 = vmatpush1.xpose.msra.mxu0 0.0
        %1044 = vmatprep.subr.mxu0 0.0
        %1045 = vmatpush1.xpose.msra.mxu0 0.0
        %1046 = vmatprep.subr.mxu0 0.0
        %1047 = vmatpush1.xpose.msra.mxu0 0.0
        %1048 = vmatprep.subr.mxu0 0.0
        %1049 = vmatpush1.xpose.msra.mxu0 0.0
        %1050 = vmatprep.subr.mxu0 0.0
        %1051 = vmatpush1.xpose.msra.mxu0 %v1018
        %1052 = vmatprep.subr.mxu0 0.0
        %1053 = vmatpush2.xpose.msra.mxu0 0.0
        %1054 = vmatprep.subr.mxu0 0.0
        %1055 = vmatpush2.xpose.msra.mxu0 0.0
        %1056 = vmatprep.subr.mxu0 0.0
        %1057 = vmatpush2.xpose.msra.mxu0 0.0
        %1058 = vmatprep.subr.mxu0 0.0
        %1059 = vmatpush2.xpose.msra.mxu0 0.0
        %1060 = vmatprep.subr.mxu0 0.0
        %1061 = vmatpush2.xpose.msra.mxu0 0.0
        %1062 = vmatprep.subr.mxu0 0.0
        %1063 = vmatpush2.xpose.msra.mxu0 0.0
        %1064 = vmatprep.subr.mxu0 0.0
        %1065 = vmatpush2.xpose.msra.mxu0 0.0
        %1066 = vmatprep.subr.mxu0 0.0
        %1067 = vmatpush2.xpose.msra.mxu0 0.0
        %1068 = vmatprep.subr.mxu0 0.0
        %1069 = vmatpush2.xpose.msra.mxu0 0.0
        %1070 = vmatprep.subr.mxu0 0.0
        %1071 = vmatpush2.xpose.msra.mxu0 0.0
        %1072 = vmatprep.subr.mxu0 0.0
        %1073 = vmatpush2.xpose.msra.mxu0 0.0
        %1074 = vmatprep.subr.mxu0 0.0
        %1075 = vmatpush2.xpose.msra.mxu0 0.0
        %1076 = vmatprep.subr.mxu0 0.0
        %1077 = vmatpush2.xpose.msra.mxu0 0.0
        %1078 = vmatprep.subr.mxu0 0.0
        %1079 = vmatpush2.xpose.msra.mxu0 0.0
        %1080 = vmatprep.subr.mxu0 0.0
        %1081 = vmatpush2.xpose.msra.mxu0 0.0
        %1082 = vmatprep.subr.mxu0 0.0
        %1083 = vmatpush2.xpose.msra.mxu0 0.0
        %1084 = vmatprep.mubr.f32.mxu0 0.0
        %1085 = vmatmul.mubr.f32.gmra.mxu0 %v1015
        %v1086 = vpop.f32.mrf.mxu0
        %v1087 = vadd.f32 0.0, %v1086
        %v1088 = vpop.f32.mrf.mxu0
        %1089 = vdwg.mxu0
        %v1090 = vsel %vm785, %v859, -inf
        %1091 = vmax.xlane.f32.xlu0 %v1090
        %v1092 = vpop.xlane.xlu0 %1091
        %v1093 = vsel %vm785, %v935, -inf
        %1094 = vmax.xlane.f32.xlu0 %v1093
        %v1095 = vpop.xlane.xlu0 %1094
        %v1096 = vsel %vm785, %v1011, -inf
        %1097 = vmax.xlane.f32.xlu0 %v1096
        %v1098 = vpop.xlane.xlu0 %1097
        %v1099 = vsel %vm785, %v1087, -inf
        %1100 = vmax.xlane.f32.xlu0 %v1099
        %v1101 = vpop.xlane.xlu0 %1100
        %v1102 = vsub.f32 %v859, %v1092
        %v1103 = vsub.f32 %v935, %v1095
        %v1104 = vsub.f32 %v1011, %v1098
        %v1105 = vsub.f32 %v1087, %v1101
        %v1106 = vmul.f32 %v1102, 1.442695
        %v1107 = vpow.pop %v1106
        %v1108 = vmul.f32 %v1103, 1.442695
        %v1109 = vpow.pop %v1108
        %v1110 = vmul.f32 %v1104, 1.442695
        %v1111 = vpow.pop %v1110
        %v1112 = vmul.f32 %v1105, 1.442695
        %v1113 = vpow.pop %v1112
        %v1114 = vsel %vm785, %v1107, 0.0
        %1115 = vadd.xlane.f32.xlu0 %v1114
        %v1116 = vpop.xlane.xlu0 %1115
        %v1117 = vsel %vm785, %v1109, 0.0
        %1118 = vadd.xlane.f32.xlu0 %v1117
        %v1119 = vpop.xlane.xlu0 %1118
        %v1120 = vsel %vm785, %v1111, 0.0
        %1121 = vadd.xlane.f32.xlu0 %v1120
        %v1122 = vpop.xlane.xlu0 %1121
        %v1123 = vsel %vm785, %v1113, 0.0
        %1124 = vadd.xlane.f32.xlu0 %v1123
        %v1125 = vpop.xlane.xlu0 %1124
        %v1126 = vrcp.pop %v1116
        %v1127 = vrcp.pop %v1119
        %v1128 = vrcp.pop %v1122
        %v1129 = vrcp.pop %v1125
        %v1130 = vmul.f32 %v1107, %v1126
        %v1131 = vmul.f32 %v1109, %v1127
        %v1132 = vmul.f32 %v1111, %v1128
        %v1133 = vmul.f32 %v1113, %v1129
        %v1135 = vsel %vm785, %v1130, 0
        %1137 = vmatprep.subr.mxu0 0.0
        %1138 = vmatpush1.msra.mxu0 0.0
        %1139 = vmatprep.subr.mxu0 0.0
        %1140 = vmatpush1.msra.mxu0 0.0
        %1141 = vmatprep.subr.mxu0 0.0
        %1142 = vmatpush1.msra.mxu0 0.0
        %1143 = vmatprep.subr.mxu0 0.0
        %1144 = vmatpush1.msra.mxu0 0.0
        %1145 = vmatprep.subr.mxu0 0.0
        %1146 = vmatpush1.msra.mxu0 0.0
        %1147 = vmatprep.subr.mxu0 0.0
        %1148 = vmatpush1.msra.mxu0 0.0
        %1149 = vmatprep.subr.mxu0 0.0
        %1150 = vmatpush1.msra.mxu0 0.0
        %1151 = vmatprep.subr.mxu0 0.0
        %1152 = vmatpush1.msra.mxu0 0.0
        %1153 = vmatprep.subr.mxu0 0.0
        %1154 = vmatpush1.msra.mxu0 0.0
        %1155 = vmatprep.subr.mxu0 0.0
        %1156 = vmatpush1.msra.mxu0 0.0
        %1157 = vmatprep.subr.mxu0 0.0
        %1158 = vmatpush1.msra.mxu0 0.0
        %1159 = vmatprep.subr.mxu0 0.0
        %1160 = vmatpush1.msra.mxu0 0.0
        %1161 = vmatprep.subr.mxu0 0.0
        %1162 = vmatpush1.msra.mxu0 0.0
        %1163 = vmatprep.subr.mxu0 0.0
        %1164 = vmatpush1.msra.mxu0 0.0
        %1165 = vmatprep.subr.mxu0 0.0
        %1166 = vmatpush1.msra.mxu0 0.0
        %1167 = vmatprep.subr.mxu0 0.0
        %1168 = vmatpush1.msra.mxu0 %v781
        %1169 = vmatprep.subr.mxu0 0.0
        %1170 = vmatpush2.msra.mxu0 0.0
        %1171 = vmatprep.subr.mxu0 0.0
        %1172 = vmatpush2.msra.mxu0 0.0
        %1173 = vmatprep.subr.mxu0 0.0
        %1174 = vmatpush2.msra.mxu0 0.0
        %1175 = vmatprep.subr.mxu0 0.0
        %1176 = vmatpush2.msra.mxu0 0.0
        %1177 = vmatprep.subr.mxu0 0.0
        %1178 = vmatpush2.msra.mxu0 0.0
        %1179 = vmatprep.subr.mxu0 0.0
        %1180 = vmatpush2.msra.mxu0 0.0
        %1181 = vmatprep.subr.mxu0 0.0
        %1182 = vmatpush2.msra.mxu0 0.0
        %1183 = vmatprep.subr.mxu0 0.0
        %1184 = vmatpush2.msra.mxu0 0.0
        %1185 = vmatprep.subr.mxu0 0.0
        %1186 = vmatpush2.msra.mxu0 0.0
        %1187 = vmatprep.subr.mxu0 0.0
        %1188 = vmatpush2.msra.mxu0 0.0
        %1189 = vmatprep.subr.mxu0 0.0
        %1190 = vmatpush2.msra.mxu0 0.0
        %1191 = vmatprep.subr.mxu0 0.0
        %1192 = vmatpush2.msra.mxu0 0.0
        %1193 = vmatprep.subr.mxu0 0.0
        %1194 = vmatpush2.msra.mxu0 0.0
        %1195 = vmatprep.subr.mxu0 0.0
        %1196 = vmatpush2.msra.mxu0 0.0
        %1197 = vmatprep.subr.mxu0 0.0
        %1198 = vmatpush2.msra.mxu0 0.0
        %1199 = vmatprep.subr.mxu0 0.0
        %1200 = vmatpush2.msra.mxu0 0.0
        %1201 = vmatprep.mubr.f32.mxu0 0.0
        %1202 = vmatmul.mubr.f32.gmra.mxu0 %v1135
        %v1203 = vpop.f32.mrf.mxu0
        %v1204 = vadd.f32 0.0, %v1203
        %v1205 = vpop.f32.mrf.mxu0
        %1206 = vdwg.mxu0
        %v1208 = vsel %vm785, %v1131, 0
        %1210 = vmatprep.subr.mxu0 0.0
        %1211 = vmatpush1.msra.mxu0 0.0
        %1212 = vmatprep.subr.mxu0 0.0
        %1213 = vmatpush1.msra.mxu0 0.0
        %1214 = vmatprep.subr.mxu0 0.0
        %1215 = vmatpush1.msra.mxu0 0.0
        %1216 = vmatprep.subr.mxu0 0.0
        %1217 = vmatpush1.msra.mxu0 0.0
        %1218 = vmatprep.subr.mxu0 0.0
        %1219 = vmatpush1.msra.mxu0 0.0
        %1220 = vmatprep.subr.mxu0 0.0
        %1221 = vmatpush1.msra.mxu0 0.0
        %1222 = vmatprep.subr.mxu0 0.0
        %1223 = vmatpush1.msra.mxu0 0.0
        %1224 = vmatprep.subr.mxu0 0.0
        %1225 = vmatpush1.msra.mxu0 0.0
        %1226 = vmatprep.subr.mxu0 0.0
        %1227 = vmatpush1.msra.mxu0 0.0
        %1228 = vmatprep.subr.mxu0 0.0
        %1229 = vmatpush1.msra.mxu0 0.0
        %1230 = vmatprep.subr.mxu0 0.0
        %1231 = vmatpush1.msra.mxu0 0.0
        %1232 = vmatprep.subr.mxu0 0.0
        %1233 = vmatpush1.msra.mxu0 0.0
        %1234 = vmatprep.subr.mxu0 0.0
        %1235 = vmatpush1.msra.mxu0 0.0
        %1236 = vmatprep.subr.mxu0 0.0
        %1237 = vmatpush1.msra.mxu0 0.0
        %1238 = vmatprep.subr.mxu0 0.0
        %1239 = vmatpush1.msra.mxu0 0.0
        %1240 = vmatprep.subr.mxu0 0.0
        %1241 = vmatpush1.msra.mxu0 %v782
        %1242 = vmatprep.subr.mxu0 0.0
        %1243 = vmatpush2.msra.mxu0 0.0
        %1244 = vmatprep.subr.mxu0 0.0
        %1245 = vmatpush2.msra.mxu0 0.0
        %1246 = vmatprep.subr.mxu0 0.0
        %1247 = vmatpush2.msra.mxu0 0.0
        %1248 = vmatprep.subr.mxu0 0.0
        %1249 = vmatpush2.msra.mxu0 0.0
        %1250 = vmatprep.subr.mxu0 0.0
        %1251 = vmatpush2.msra.mxu0 0.0
        %1252 = vmatprep.subr.mxu0 0.0
        %1253 = vmatpush2.msra.mxu0 0.0
        %1254 = vmatprep.subr.mxu0 0.0
        %1255 = vmatpush2.msra.mxu0 0.0
        %1256 = vmatprep.subr.mxu0 0.0
        %1257 = vmatpush2.msra.mxu0 0.0
        %1258 = vmatprep.subr.mxu0 0.0
        %1259 = vmatpush2.msra.mxu0 0.0
        %1260 = vmatprep.subr.mxu0 0.0
        %1261 = vmatpush2.msra.mxu0 0.0
        %1262 = vmatprep.subr.mxu0 0.0
        %1263 = vmatpush2.msra.mxu0 0.0
        %1264 = vmatprep.subr.mxu0 0.0
        %1265 = vmatpush2.msra.mxu0 0.0
        %1266 = vmatprep.subr.mxu0 0.0
        %1267 = vmatpush2.msra.mxu0 0.0
        %1268 = vmatprep.subr.mxu0 0.0
        %1269 = vmatpush2.msra.mxu0 0.0
        %1270 = vmatprep.subr.mxu0 0.0
        %1271 = vmatpush2.msra.mxu0 0.0
        %1272 = vmatprep.subr.mxu0 0.0
        %1273 = vmatpush2.msra.mxu0 0.0
        %1274 = vmatprep.mubr.f32.mxu0 0.0
        %1275 = vmatmul.mubr.f32.gmra.mxu0 %v1208
        %v1276 = vpop.f32.mrf.mxu0
        %v1277 = vadd.f32 0.0, %v1276
        %v1278 = vpop.f32.mrf.mxu0
        %1279 = vdwg.mxu0
        %v1281 = vsel %vm785, %v1132, 0
        %1283 = vmatprep.subr.mxu0 0.0
        %1284 = vmatpush1.msra.mxu0 0.0
        %1285 = vmatprep.subr.mxu0 0.0
        %1286 = vmatpush1.msra.mxu0 0.0
        %1287 = vmatprep.subr.mxu0 0.0
        %1288 = vmatpush1.msra.mxu0 0.0
        %1289 = vmatprep.subr.mxu0 0.0
        %1290 = vmatpush1.msra.mxu0 0.0
        %1291 = vmatprep.subr.mxu0 0.0
        %1292 = vmatpush1.msra.mxu0 0.0
        %1293 = vmatprep.subr.mxu0 0.0
        %1294 = vmatpush1.msra.mxu0 0.0
        %1295 = vmatprep.subr.mxu0 0.0
        %1296 = vmatpush1.msra.mxu0 0.0
        %1297 = vmatprep.subr.mxu0 0.0
        %1298 = vmatpush1.msra.mxu0 0.0
        %1299 = vmatprep.subr.mxu0 0.0
        %1300 = vmatpush1.msra.mxu0 0.0
        %1301 = vmatprep.subr.mxu0 0.0
        %1302 = vmatpush1.msra.mxu0 0.0
        %1303 = vmatprep.subr.mxu0 0.0
        %1304 = vmatpush1.msra.mxu0 0.0
        %1305 = vmatprep.subr.mxu0 0.0
        %1306 = vmatpush1.msra.mxu0 0.0
        %1307 = vmatprep.subr.mxu0 0.0
        %1308 = vmatpush1.msra.mxu0 0.0
        %1309 = vmatprep.subr.mxu0 0.0
        %1310 = vmatpush1.msra.mxu0 0.0
        %1311 = vmatprep.subr.mxu0 0.0
        %1312 = vmatpush1.msra.mxu0 0.0
        %1313 = vmatprep.subr.mxu0 0.0
        %1314 = vmatpush1.msra.mxu0 %v783
        %1315 = vmatprep.subr.mxu0 0.0
        %1316 = vmatpush2.msra.mxu0 0.0
        %1317 = vmatprep.subr.mxu0 0.0
        %1318 = vmatpush2.msra.mxu0 0.0
        %1319 = vmatprep.subr.mxu0 0.0
        %1320 = vmatpush2.msra.mxu0 0.0
        %1321 = vmatprep.subr.mxu0 0.0
        %1322 = vmatpush2.msra.mxu0 0.0
        %1323 = vmatprep.subr.mxu0 0.0
        %1324 = vmatpush2.msra.mxu0 0.0
        %1325 = vmatprep.subr.mxu0 0.0
        %1326 = vmatpush2.msra.mxu0 0.0
        %1327 = vmatprep.subr.mxu0 0.0
        %1328 = vmatpush2.msra.mxu0 0.0
        %1329 = vmatprep.subr.mxu0 0.0
        %1330 = vmatpush2.msra.mxu0 0.0
        %1331 = vmatprep.subr.mxu0 0.0
        %1332 = vmatpush2.msra.mxu0 0.0
        %1333 = vmatprep.subr.mxu0 0.0
        %1334 = vmatpush2.msra.mxu0 0.0
        %1335 = vmatprep.subr.mxu0 0.0
        %1336 = vmatpush2.msra.mxu0 0.0
        %1337 = vmatprep.subr.mxu0 0.0
        %1338 = vmatpush2.msra.mxu0 0.0
        %1339 = vmatprep.subr.mxu0 0.0
        %1340 = vmatpush2.msra.mxu0 0.0
        %1341 = vmatprep.subr.mxu0 0.0
        %1342 = vmatpush2.msra.mxu0 0.0
        %1343 = vmatprep.subr.mxu0 0.0
        %1344 = vmatpush2.msra.mxu0 0.0
        %1345 = vmatprep.subr.mxu0 0.0
        %1346 = vmatpush2.msra.mxu0 0.0
        %1347 = vmatprep.mubr.f32.mxu0 0.0
        %1348 = vmatmul.mubr.f32.gmra.mxu0 %v1281
        %v1349 = vpop.f32.mrf.mxu0
        %v1350 = vadd.f32 0.0, %v1349
        %v1351 = vpop.f32.mrf.mxu0
        %1352 = vdwg.mxu0
        %v1354 = vsel %vm785, %v1133, 0
        %1356 = vmatprep.subr.mxu0 0.0
        %1357 = vmatpush1.msra.mxu0 0.0
        %1358 = vmatprep.subr.mxu0 0.0
        %1359 = vmatpush1.msra.mxu0 0.0
        %1360 = vmatprep.subr.mxu0 0.0
        %1361 = vmatpush1.msra.mxu0 0.0
        %1362 = vmatprep.subr.mxu0 0.0
        %1363 = vmatpush1.msra.mxu0 0.0
        %1364 = vmatprep.subr.mxu0 0.0
        %1365 = vmatpush1.msra.mxu0 0.0
        %1366 = vmatprep.subr.mxu0 0.0
        %1367 = vmatpush1.msra.mxu0 0.0
        %1368 = vmatprep.subr.mxu0 0.0
        %1369 = vmatpush1.msra.mxu0 0.0
        %1370 = vmatprep.subr.mxu0 0.0
        %1371 = vmatpush1.msra.mxu0 0.0
        %1372 = vmatprep.subr.mxu0 0.0
        %1373 = vmatpush1.msra.mxu0 0.0
        %1374 = vmatprep.subr.mxu0 0.0
        %1375 = vmatpush1.msra.mxu0 0.0
        %1376 = vmatprep.subr.mxu0 0.0
        %1377 = vmatpush1.msra.mxu0 0.0
        %1378 = vmatprep.subr.mxu0 0.0
        %1379 = vmatpush1.msra.mxu0 0.0
        %1380 = vmatprep.subr.mxu0 0.0
        %1381 = vmatpush1.msra.mxu0 0.0
        %1382 = vmatprep.subr.mxu0 0.0
        %1383 = vmatpush1.msra.mxu0 0.0
        %1384 = vmatprep.subr.mxu0 0.0
        %1385 = vmatpush1.msra.mxu0 0.0
        %1386 = vmatprep.subr.mxu0 0.0
        %1387 = vmatpush1.msra.mxu0 %v784
        %1388 = vmatprep.subr.mxu0 0.0
        %1389 = vmatpush2.msra.mxu0 0.0
        %1390 = vmatprep.subr.mxu0 0.0
        %1391 = vmatpush2.msra.mxu0 0.0
        %1392 = vmatprep.subr.mxu0 0.0
        %1393 = vmatpush2.msra.mxu0 0.0
        %1394 = vmatprep.subr.mxu0 0.0
        %1395 = vmatpush2.msra.mxu0 0.0
        %1396 = vmatprep.subr.mxu0 0.0
        %1397 = vmatpush2.msra.mxu0 0.0
        %1398 = vmatprep.subr.mxu0 0.0
        %1399 = vmatpush2.msra.mxu0 0.0
        %1400 = vmatprep.subr.mxu0 0.0
        %1401 = vmatpush2.msra.mxu0 0.0
        %1402 = vmatprep.subr.mxu0 0.0
        %1403 = vmatpush2.msra.mxu0 0.0
        %1404 = vmatprep.subr.mxu0 0.0
        %1405 = vmatpush2.msra.mxu0 0.0
        %1406 = vmatprep.subr.mxu0 0.0
        %1407 = vmatpush2.msra.mxu0 0.0
        %1408 = vmatprep.subr.mxu0 0.0
        %1409 = vmatpush2.msra.mxu0 0.0
        %1410 = vmatprep.subr.mxu0 0.0
        %1411 = vmatpush2.msra.mxu0 0.0
        %1412 = vmatprep.subr.mxu0 0.0
        %1413 = vmatpush2.msra.mxu0 0.0
        %1414 = vmatprep.subr.mxu0 0.0
        %1415 = vmatpush2.msra.mxu0 0.0
        %1416 = vmatprep.subr.mxu0 0.0
        %1417 = vmatpush2.msra.mxu0 0.0
        %1418 = vmatprep.subr.mxu0 0.0
        %1419 = vmatpush2.msra.mxu0 0.0
        %1420 = vmatprep.mubr.f32.mxu0 0.0
        %1421 = vmatmul.mubr.f32.gmra.mxu0 %v1354
        %v1422 = vpop.f32.mrf.mxu0
        %v1423 = vadd.f32 0.0, %v1422
        %v1424 = vpop.f32.mrf.mxu0
        %1425 = vdwg.mxu0
        %v1426 = vcombine.low %v1204, %v1350
        %v1427 = vcombine.high %v1204, %v1350
        %v1429 = vunpack.c.l.s4 1983009808
        %v1430 = vunpack.c.0.s8 %v1429
        %v1431 = vlaneseq
        %v1432 = vshrl.u32 %v1431, 7
        %v1433 = vsub.s32 %v1430, %v1432
        %v1434 = vrot.slane %v1426, %v1433
        %v1436 = vunpack.c.l.s4 1983009808
        %v1437 = vunpack.c.0.s8 %v1436
        %v1438 = vlaneseq
        %v1439 = vshrl.u32 %v1438, 7
        %v1440 = vsub.s32 %v1437, %v1439
        %v1441 = vrot.slane %v1427, %v1440
        %v1442 = vcombine.low %v1277, %v1423
        %v1443 = vcombine.high %v1277, %v1423
        %v1445 = vunpack.c.l.s4 1983009808
        %v1446 = vunpack.c.0.s8 %v1445
        %v1447 = vlaneseq
        %v1448 = vshrl.u32 %v1447, 7
        %v1449 = vsub.s32 %v1446, %v1448
        %v1450 = vrot.slane %v1442, %v1449
        %v1452 = vunpack.c.l.s4 1983009808
        %v1453 = vunpack.c.0.s8 %v1452
        %v1454 = vlaneseq
        %v1455 = vshrl.u32 %v1454, 7
        %v1456 = vsub.s32 %v1453, %v1455
        %v1457 = vrot.slane %v1443, %v1456
        %v1458 = vcombine.low %v1434, %v1450
        %v1459 = vcombine.high %v1434, %v1450
        %v1461 = vunpack.c.l.s4 1934713408
        %v1462 = vunpack.c.0.s8 %v1461
        %v1463 = vlaneseq
        %v1464 = vshrl.u32 %v1463, 7
        %v1465 = vsub.s32 %v1462, %v1464
        %v1466 = vrot.slane %v1458, %v1465
        %v1468 = vunpack.c.l.s4 1934713408
        %v1469 = vunpack.c.0.s8 %v1468
        %v1470 = vlaneseq
        %v1471 = vshrl.u32 %v1470, 7
        %v1472 = vsub.s32 %v1469, %v1471
        %v1473 = vrot.slane %v1459, %v1472
        %v1474 = vcombine.low %v1441, %v1457
        %v1475 = vcombine.high %v1441, %v1457
        %v1477 = vunpack.c.l.s4 1934713408
        %v1478 = vunpack.c.0.s8 %v1477
        %v1479 = vlaneseq
        %v1480 = vshrl.u32 %v1479, 7
        %v1481 = vsub.s32 %v1478, %v1480
        %v1482 = vrot.slane %v1474, %v1481
        %v1484 = vunpack.c.l.s4 1934713408
        %v1485 = vunpack.c.0.s8 %v1484
        %v1486 = vlaneseq
        %v1487 = vshrl.u32 %v1486, 7
        %v1488 = vsub.s32 %v1485, %v1487
        %v1489 = vrot.slane %v1475, %v1488
        %v1490 = vcombine.high %v1466, 0.0
        %v1491 = vcombine.high %v1473, 0.0
        %v1492 = vcombine.high %v1482, 0.0
        %v1493 = vcombine.high %v1489, 0.0
        %v1494 = vcombine.low %v1466, %v1473
        %v1496 = vunpack.c.l.s4 1983009808
        %v1497 = vunpack.c.0.s8 %v1496
        %v1498 = vlaneseq
        %v1499 = vshrl.u32 %v1498, 7
        %v1500 = vsub.s32 %v1497, %v1499
        %v1501 = vrot.slane %v1494, %v1500
        %v1502 = vcombine.low %v1490, %v1491
        %v1504 = vunpack.c.l.s4 1983009808
        %v1505 = vunpack.c.0.s8 %v1504
        %v1506 = vlaneseq
        %v1507 = vshrl.u32 %v1506, 7
        %v1508 = vsub.s32 %v1505, %v1507
        %v1509 = vrot.slane %v1502, %v1508
        %v1510 = vcombine.low %v1482, %v1489
        %v1512 = vunpack.c.l.s4 1983009808
        %v1513 = vunpack.c.0.s8 %v1512
        %v1514 = vlaneseq
        %v1515 = vshrl.u32 %v1514, 7
        %v1516 = vsub.s32 %v1513, %v1515
        %v1517 = vrot.slane %v1510, %v1516
        %v1518 = vcombine.low %v1492, %v1493
        %v1520 = vunpack.c.l.s4 1983009808
        %v1521 = vunpack.c.0.s8 %v1520
        %v1522 = vlaneseq
        %v1523 = vshrl.u32 %v1522, 7
        %v1524 = vsub.s32 %v1521, %v1523
        %v1525 = vrot.slane %v1518, %v1524
        %v1526 = vcombine.low %v1501, %v1509
        %v1527 = vcombine.high %v1501, %v1509
        %v1529 = vunpack.c.l.s4 1934713408
        %v1530 = vunpack.c.0.s8 %v1529
        %v1531 = vlaneseq
        %v1532 = vshrl.u32 %v1531, 7
        %v1533 = vsub.s32 %v1530, %v1532
        %v1534 = vrot.slane %v1526, %v1533
        %v1536 = vunpack.c.l.s4 1934713408
        %v1537 = vunpack.c.0.s8 %v1536
        %v1538 = vlaneseq
        %v1539 = vshrl.u32 %v1538, 7
        %v1540 = vsub.s32 %v1537, %v1539
        %v1541 = vrot.slane %v1527, %v1540
        %v1542 = vcombine.low %v1517, %v1525
        %v1543 = vcombine.high %v1517, %v1525
        %v1545 = vunpack.c.l.s4 1934713408
        %v1546 = vunpack.c.0.s8 %v1545
        %v1547 = vlaneseq
        %v1548 = vshrl.u32 %v1547, 7
        %v1549 = vsub.s32 %v1546, %v1548
        %v1550 = vrot.slane %v1542, %v1549
        %v1552 = vunpack.c.l.s4 1934713408
        %v1553 = vunpack.c.0.s8 %v1552
        %v1554 = vlaneseq
        %v1555 = vshrl.u32 %v1554, 7
        %v1556 = vsub.s32 %v1553, %v1555
        %v1557 = vrot.slane %v1543, %v1556
        %v1558 = vcombine.low %v1534, %v1550
        %v1559 = vcombine.high %v1534, %v1550
        %v1560 = vcombine.low %v1541, %v1557
        %v1561 = vcombine.high %v1541, %v1557
        %1563 = vrot.lane.b32.xlu0 %v1559, 8
        %v1564 = vpop.permute.xlu0 %1563
        %1567 = vrot.lane.b32.xlu0 %v1560, 16
        %v1568 = vpop.permute.xlu0 %1567
        %1571 = vrot.lane.b32.xlu0 %v1561, 24
        %v1572 = vpop.permute.xlu0 %1571
        %v1574 = vsel %vm785, %v1558, %v1564
        %vm1575 = vcmask 130048
        %v1576 = vsel %vm1575, %v1574, %v1568
        %vm1577 = vcmask 195584
        %v1578 = vsel %vm1577, %v1576, %v1572
        %v1579 = vpack.c.bf16 %v1578, %v1578
        %v1580 = vld [vmem:[#allocation7] sm:$0xf]
        %v1581 = vld [vmem:[#allocation7 + $0x4] sm:$0xf]
        %v1582 = vld [vmem:[#allocation7 + $0x8] sm:$0xf]
        %v1583 = vld [vmem:[#allocation7 + $0xc] sm:$0xf]
        %v1584 = vld [vmem:[%s4] sm:$0x1]
        %v1586 = vlaneseq
        %v1587 = vshrl.u32 %v1586, 7
        %v1588 = vsub.s32 0, %v1587
        %v1589 = vrot.slane %v1584, %v1588
        %v1595 = vunpack.c.l.b16 %v1580
        %v1596 = vunpack.c.l.b16 %v1581
        %v1597 = vunpack.c.l.b16 %v1582
        %v1598 = vunpack.c.l.b16 %v1583
        %v1599 = vpack.c.b16 %v1596, %v1595
        %v1600 = vpack.c.b16 %v1598, %v1597
        %v1604 = vsel %vm295, %v1579, 0
        %1606 = vmatprep.subr.bf16.mxu0 0
        %1607 = vmatpush1.bf16.msra.mxu0 0
        %1608 = vmatprep.subr.bf16.mxu0 0
        %1609 = vmatpush1.bf16.msra.mxu0 0
        %1610 = vmatprep.subr.bf16.mxu0 0
        %1611 = vmatpush1.bf16.msra.mxu0 0
        %1612 = vmatprep.subr.bf16.mxu0 0
        %1613 = vmatpush1.bf16.msra.mxu0 0
        %1614 = vmatprep.subr.bf16.mxu0 0
        %1615 = vmatpush1.bf16.msra.mxu0 0
        %1616 = vmatprep.subr.bf16.mxu0 0
        %1617 = vmatpush1.bf16.msra.mxu0 0
        %1618 = vmatprep.subr.bf16.mxu0 0
        %1619 = vmatpush1.bf16.msra.mxu0 %v1600
        %1620 = vmatprep.subr.bf16.mxu0 0
        %1621 = vmatpush1.bf16.msra.mxu0 %v1599
        %1622 = vmatprep.subr.bf16.mxu0 0
        %1623 = vmatpush2.bf16.msra.mxu0 0
        %1624 = vmatprep.subr.bf16.mxu0 0
        %1625 = vmatpush2.bf16.msra.mxu0 0
        %1626 = vmatprep.subr.bf16.mxu0 0
        %1627 = vmatpush2.bf16.msra.mxu0 0
        %1628 = vmatprep.subr.bf16.mxu0 0
        %1629 = vmatpush2.bf16.msra.mxu0 0
        %1630 = vmatprep.subr.bf16.mxu0 0
        %1631 = vmatpush2.bf16.msra.mxu0 0
        %1632 = vmatprep.subr.bf16.mxu0 0
        %1633 = vmatpush2.bf16.msra.mxu0 0
        %1634 = vmatprep.subr.bf16.mxu0 0
        %1635 = vmatpush2.bf16.msra.mxu0 0
        %1636 = vmatprep.subr.bf16.mxu0 0
        %1637 = vmatpush2.bf16.msra.mxu0 0
        %1638 = vmatprep.mubr.bf16.mxu0 0
        %1639 = vmatmul.mubr.bf16.gmra.mxu0 %v1604
        %v1640 = vpop.f32.mrf.mxu0
        %v1641 = vadd.f32 %v1589, %v1640
        %v1642 = vpop.f32.mrf.mxu0
        %v1643 = vpop.f32.mrf.mxu0
        %v1644 = vpop.f32.mrf.mxu0
        %1645 = vdwg.mxu0
        %1646 = vst.msk [vmem:[%s268] sm:$0xff] %vm295, %v1641
        %s1647 = sand.u32 %s141, 1
        %s1648 = scalar_lea.sflag [#allocation4], %s1647
        %s1649 = sand.u32 %s141, 1
        %s1650 = smul.addr %s1649, 8
        %s1651 = scalar_lea.vmem [#allocation8], %s1650
        // Predicated region
        $region53: #{tpu_custom_call.1} parent=39 // pred_check
          %p1652 = pneg %p151
        $region54: #{tpu_custom_call.1} parent=39 // pred_check_branch
          %1654 = sbr.rel (%p1652) target = $region56
        $region55: #{tpu_custom_call.1} parent=39 // pred_region
          %s1656 = ssub.s32 128, 128
          %1657 = vsyncadd %s1648, %s1656
          %s1658 = smul.addr %s23, 128
          %s1659 = scalar_lea.hbm %s5, %s1658
          %s1661 = sshll.u32 %s1651, 4
          %s1662 = int_to_ptr.vmem [resolvable:$true] %s1661
          %1664 = dma.vmem_to_hbm [thread:$0]  %s1662, 128, %s1659, %s1648
        $region56: #{tpu_custom_call.1} parent=39 // pred_fallthru
          _
      $region40: #{tpu_custom_call.1} parent=5 // pred_fallthru
        _
      %p1665 = scmp.le.s32.totalorder 2, %s18
      // Predicated region
      $region57: #{tpu_custom_call.1} parent=5 // pred_check
        %p1666 = pneg %p1665
      $region58: #{tpu_custom_call.1} parent=5 // pred_check_branch
        %1668 = sbr.rel (%p1666) target = $region60
      $region59: #{tpu_custom_call.1} parent=5 // pred_region
        %s1669 = ssub.s32 %s18, 2
        // Predicated region
        $region61: #{tpu_custom_call.1} parent=59 // pred_check
          %p1670 = pneg %p157
        $region62: #{tpu_custom_call.1} parent=59 // pred_check_branch
          %1672 = sbr.rel (%p1670) target = $region64
        $region63: #{tpu_custom_call.1} parent=59 // pred_region
          %s1673 = sand.u32 %s142, 1
          %s1674 = scalar_lea.sflag [#allocation4], %s1673
          %s1675 = sand.u32 %s142, 1
          %s1676 = smul.addr %s1675, 8
          %s1677 = scalar_lea.vmem [#allocation8], %s1676
          %1678 = dma.done %s1674, 128
        $region64: #{tpu_custom_call.1} parent=59 // pred_fallthru
          _
      $region60: #{tpu_custom_call.1} parent=5 // pred_fallthru
        _
    $region6: #{tpu_custom_call.1} parent=1 // loop_footer
      %s22 = sadd.s32 1, %s18
    $region7: #{tpu_custom_call.1} parent=1 // loop_footer_branch
      %17 = sbr.rel target = $region3
    $region8: #{tpu_custom_call.1} parent=1 // loop_exit
      _
    %1679 = vsyncpa [#allocation3], 1
    %s1680 = scalar_lea.sflag [#allocation3], 1
    %1681 = vsyncpa %s1680, 1
    %1682 = vsyncpa [#allocation6], 1
    %1683 = vsyncpa [#allocation4], 1
    %s1684 = scalar_lea.sflag [#allocation4], 1
    %1685 = vsyncpa %s1684, 1

</llo_original>
